<compile_context>
chip_gen: v7x
topology: tpu7x:2x2x1
jax: 0.10.0
libtpu: 0.0.40
codegen_flags: <defaults>
</compile_context>

<pallas_src>
import jax
import jax.numpy as jnp
from jax import lax
from jax.experimental import pallas as pl
from jax.experimental.pallas import tpu as pltpu

N = 2      # batch
C = 4      # channels (in == out)
H = 16
W = 16
K = 3
HW = H * W
EPS = 1e-5


def _row_shift(z, dy):
    """Value at (h + dy, w) with reflect padding, on row-major (C, H*W)."""
    if dy == 0:
        return z
    if dy < 0:   # h == 0 reflects to row 1
        return jnp.concatenate([z[:, W:2 * W], z[:, :(H - 1) * W]], axis=1)
    # dy > 0: h == H-1 reflects to row H-2
    return jnp.concatenate([z[:, W:], z[:, (H - 2) * W:(H - 1) * W]], axis=1)


def _col_shift(z, dx, w_first, w_last):
    """Value at (h, w + dx) with reflect padding, on row-major (C, H*W)."""
    if dx == 0:
        return z
    shifted = jnp.roll(z, -dx, axis=1)   # value from flat index p + dx
    reflect = jnp.roll(z, dx, axis=1)    # reflected value (from p - dx)
    bad = w_first if dx < 0 else w_last  # lanes whose neighbour is off-edge
    return jnp.where(bad, reflect, shifted)


def _resblock_kernel(x_ref, w1_ref, b1_ref, w2_ref, b2_ref, out_ref):
    """Fully fused ResBlock forward for one image.

    x_ref  : (1, C, H*W) f32  VMEM  (lane-dense, row-major spatial)
    w*_ref : (C, K*K*C)  f32  VMEM  (rows: out channel; cols: (dy, dx, ci))
    b*_ref : (C, 1)      f32  VMEM
    out_ref: (1, C, H*W) f32  VMEM
    """
    z = x_ref[0]  # (C, HW)

    # Column-boundary masks, computed once and shared by both conv blocks.
    col = lax.broadcasted_iota(jnp.int32, (C, HW), 1)
    w_idx = col % W
    w_first = w_idx == 0
    w_last = w_idx == (W - 1)

    def conv_in(zin, wmat, bias, use_act):
        # 3x3 reflect-padded conv as 9 shifted views + one small matmul.
        taps = []
        for dy in (-1, 0, 1):
            zr = _row_shift(zin, dy)
            for dx in (-1, 0, 1):
                taps.append(_col_shift(zr, dx, w_first, w_last))
        patches = jnp.concatenate(taps, axis=0)                  # (9*C, HW)
        y = jnp.dot(wmat, patches,
                    preferred_element_type=jnp.float32,
                    precision=lax.Precision.HIGHEST)             # (C, HW)
        y = y + bias                                             # (C,1) bcast
        # InstanceNorm2d (no affine, biased variance), single-pass stats.
        mean = jnp.mean(y, axis=1, keepdims=True)
        msq = jnp.mean(y * y, axis=1, keepdims=True)
        var = jnp.maximum(msq - mean * mean, 0.0)
        y = (y - mean) * lax.rsqrt(var + EPS)
        if use_act:
            y = jnp.maximum(y, 0.0)
        return y

    h = conv_in(z, w1_ref[...], b1_ref[...], use_act=True)       # block 1
    y = conv_in(h, w2_ref[...], b2_ref[...], use_act=False)      # block 2
    out_ref[0] = z + y                                           # residual add


def _prep_weight(w):
    # (C_out, C_in, K, K) -> (C_out, K*K*C_in) ordered (dy, dx, ci),
    # matching the tap/channel ordering of `patches` in the kernel.
    return jnp.transpose(w, (0, 2, 3, 1)).reshape(C, K * K * C).astype(jnp.float32)


@jax.jit
def res_block(x, w1, b1, w2, b2):
    """x: (N, C, H, W) float32 -> (N, C, H, W) float32."""
    n = x.shape[0]
    xf = x.reshape(n, C, HW).astype(jnp.float32)   # free, lane-dense view
    out = pl.pallas_call(
        _resblock_kernel,
        out_shape=jax.ShapeDtypeStruct((n, C, HW), jnp.float32),
        grid=(n,),
        in_specs=[
            pl.BlockSpec((1, C, HW), lambda i: (i, 0, 0)),
            pl.BlockSpec((C, K * K * C), lambda i: (0, 0)),
            pl.BlockSpec((C, 1), lambda i: (0, 0)),
            pl.BlockSpec((C, K * K * C), lambda i: (0, 0)),
            pl.BlockSpec((C, 1), lambda i: (0, 0)),
        ],
        out_specs=pl.BlockSpec((1, C, HW), lambda i: (i, 0, 0)),
        compiler_params=pltpu.CompilerParams(
            dimension_semantics=("parallel",)),
    )(xf, _prep_weight(w1), b1.reshape(C, 1).astype(jnp.float32),
      _prep_weight(w2), b2.reshape(C, 1).astype(jnp.float32))
    return out.reshape(n, C, H, W)


# ---------------- pure-JAX reference for verification ----------------
def _ref_convblock(x, w, b, use_act):
    xp = jnp.pad(x, ((0, 0), (0, 0), (1, 1), (1, 1)), mode="reflect")
    y = lax.conv_general_dilated(
        xp, w, window_strides=(1, 1), padding="VALID",
        dimension_numbers=("NCHW", "OIHW", "NCHW"),
        precision=lax.Precision.HIGHEST)
    y = y + b[None, :, None, None]
    mean = y.mean(axis=(2, 3), keepdims=True)
    var = y.var(axis=(2, 3), keepdims=True)   # biased, like InstanceNorm2d
    y = (y - mean) / jnp.sqrt(var + EPS)
    if use_act:
        y = jnp.maximum(y, 0.0)
    return y


def _ref_resblock(x, w1, b1, w2, b2):
    h = _ref_convblock(x, w1, b1, use_act=True)
    h = _ref_convblock(h, w2, b2, use_act=False)
    return x + h


if __name__ == "__main__":
    key = jax.random.PRNGKey(0)
    kx, kw1, kb1, kw2, kb2 = jax.random.split(key, 5)

    x = jax.random.normal(kx, (N, C, H, W), dtype=jnp.float32)

    # Deterministic synthetic parameters (PyTorch default-ish uniform init).
    fan_in = C * K * K
    bound = 1.0 / float(fan_in) ** 0.5
    w1 = jax.random.uniform(kw1, (C, C, K, K), jnp.float32, -bound, bound)
    b1 = jax.random.uniform(kb1, (C,), jnp.float32, -bound, bound)
    w2 = jax.random.uniform(kw2, (C, C, K, K), jnp.float32, -bound, bound)
    b2 = jax.random.uniform(kb2, (C,), jnp.float32, -bound, bound)

    out = jax.block_until_ready(res_block(x, w1, b1, w2, b2))

    ref = _ref_resblock(x, w1, b1, w2, b2)
    assert out.shape == (N, C, H, W)
    err = float(jnp.max(jnp.abs(out - ref)))
    assert jnp.allclose(out, ref, atol=1e-3, rtol=1e-3), (
        f"mismatch vs reference: max abs err = {err}")

    print("KERNEL_OK")
</pallas_src>

<mosaic_0001>
module attributes {stable_mosaic.version = 11 : i64} {
  func.func @_resblock_kernel(%arg0: i32, %arg1: memref<1x4x256xf32, #tpu.memory_space<vmem>>, %arg2: memref<4x36xf32, #tpu.memory_space<vmem>>, %arg3: memref<4x1xf32, #tpu.memory_space<vmem>>, %arg4: memref<4x36xf32, #tpu.memory_space<vmem>>, %arg5: memref<4x1xf32, #tpu.memory_space<vmem>>, %arg6: memref<1x4x256xf32, #tpu.memory_space<vmem>>) attributes {dimension_semantics = [#tpu.dimension_semantics<parallel>], iteration_bounds = array<i64: 2>, scalar_prefetch = 0 : i64, scratch_operands = 0 : i64, tpu.core_type = #tpu.core_type<tc>, window_params = [{transform_indices = @transform_0, window_bounds = array<i64: 1, 4, 256>}, {pipeline_mode = #tpu.pipeline_mode<synchronous>, transform_indices = @transform_1, window_bounds = array<i64: 4, 36>}, {pipeline_mode = #tpu.pipeline_mode<synchronous>, transform_indices = @transform_2, window_bounds = array<i64: 4, 1>}, {pipeline_mode = #tpu.pipeline_mode<synchronous>, transform_indices = @transform_3, window_bounds = array<i64: 4, 36>}, {pipeline_mode = #tpu.pipeline_mode<synchronous>, transform_indices = @transform_4, window_bounds = array<i64: 4, 1>}, {transform_indices = @transform_5, window_bounds = array<i64: 1, 4, 256>}]} {
    %c0 = arith.constant 0 : index
    %c0_0 = arith.constant 0 : index
    %c0_1 = arith.constant 0 : index
    %0 = vector.load %arg1[%c0, %c0_0, %c0_1] : memref<1x4x256xf32, #tpu.memory_space<vmem>>, vector<1x4x256xf32>
    %1 = vector.shape_cast %0 : vector<1x4x256xf32> to vector<4x256xf32>
    %2 = tpu.iota {dimensions = array<i32: 1>} : vector<4x256xi32>
    %c16_i32 = arith.constant 16 : i32
    %c0_i32 = arith.constant 0 : i32
    %3 = arith.cmpi eq, %c16_i32, %c0_i32 : i32
    %c1_i32 = arith.constant 1 : i32
    %4 = arith.select %3, %c1_i32, %c16_i32 : i32
    %5 = vector.broadcast %4 : i32 to vector<4x256xi32>
    %6 = arith.remsi %2, %5 : vector<4x256xi32>
    %c0_i32_2 = arith.constant 0 : i32
    %7 = vector.broadcast %c0_i32_2 : i32 to vector<4x256xi32>
    %8 = arith.cmpi ne, %6, %7 : vector<4x256xi32>
    %c0_i32_3 = arith.constant 0 : i32
    %9 = vector.broadcast %c0_i32_3 : i32 to vector<4x256xi32>
    %10 = arith.cmpi slt, %6, %9 : vector<4x256xi32>
    %c0_i32_4 = arith.constant 0 : i32
    %11 = arith.cmpi slt, %4, %c0_i32_4 : i32
    %12 = vector.broadcast %11 : i1 to vector<4x256xi1>
    %13 = vector.broadcast %12 : vector<4x256xi1> to vector<4x256xi1>
    %14 = arith.xori %10, %13 : vector<4x256xi1>
    %15 = arith.andi %14, %8 : vector<4x256xi1>
    %16 = vector.broadcast %4 : i32 to vector<4x256xi32>
    %17 = arith.addi %6, %16 : vector<4x256xi32>
    %18 = arith.select %15, %17, %6 : vector<4x256xi1>, vector<4x256xi32>
    %c0_i32_5 = arith.constant 0 : i32
    %19 = vector.broadcast %c0_i32_5 : i32 to vector<4x256xi32>
    %20 = arith.cmpi eq, %18, %19 : vector<4x256xi32>
    %c15_i32 = arith.constant 15 : i32
    %21 = vector.broadcast %c15_i32 : i32 to vector<4x256xi32>
    %22 = arith.cmpi eq, %18, %21 : vector<4x256xi32>
    %c0_6 = arith.constant 0 : index
    %c0_7 = arith.constant 0 : index
    %23 = vector.load %arg2[%c0_6, %c0_7] : memref<4x36xf32, #tpu.memory_space<vmem>>, vector<4x36xf32>
    %c0_8 = arith.constant 0 : index
    %c0_9 = arith.constant 0 : index
    %24 = vector.load %arg3[%c0_8, %c0_9] : memref<4x1xf32, #tpu.memory_space<vmem>>, vector<4x1xf32>
    %25 = vector.extract_strided_slice %1 {offsets = [0, 16], sizes = [4, 16], strides = [1, 1]} : vector<4x256xf32> to vector<4x16xf32>
    %26 = vector.extract_strided_slice %1 {offsets = [0, 0], sizes = [4, 240], strides = [1, 1]} : vector<4x256xf32> to vector<4x240xf32>
    %27 = tpu.concatenate %25, %26 in 1 : vector<4x16xf32>, vector<4x240xf32> -> vector<4x256xf32>
    %28 = vector.extract_strided_slice %27 {offsets = [0, 255], sizes = [4, 1], strides = [1, 1]} : vector<4x256xf32> to vector<4x1xf32>
    %29 = vector.extract_strided_slice %27 {offsets = [0, 0], sizes = [4, 255], strides = [1, 1]} : vector<4x256xf32> to vector<4x255xf32>
    %30 = tpu.concatenate %28, %29 in 1 : vector<4x1xf32>, vector<4x255xf32> -> vector<4x256xf32>
    %31 = vector.extract_strided_slice %27 {offsets = [0, 1], sizes = [4, 255], strides = [1, 1]} : vector<4x256xf32> to vector<4x255xf32>
    %32 = vector.extract_strided_slice %27 {offsets = [0, 0], sizes = [4, 1], strides = [1, 1]} : vector<4x256xf32> to vector<4x1xf32>
    %33 = tpu.concatenate %31, %32 in 1 : vector<4x255xf32>, vector<4x1xf32> -> vector<4x256xf32>
    %34 = arith.select %20, %33, %30 : vector<4x256xi1>, vector<4x256xf32>
    %35 = vector.extract_strided_slice %27 {offsets = [0, 1], sizes = [4, 255], strides = [1, 1]} : vector<4x256xf32> to vector<4x255xf32>
    %36 = vector.extract_strided_slice %27 {offsets = [0, 0], sizes = [4, 1], strides = [1, 1]} : vector<4x256xf32> to vector<4x1xf32>
    %37 = tpu.concatenate %35, %36 in 1 : vector<4x255xf32>, vector<4x1xf32> -> vector<4x256xf32>
    %38 = vector.extract_strided_slice %27 {offsets = [0, 255], sizes = [4, 1], strides = [1, 1]} : vector<4x256xf32> to vector<4x1xf32>
    %39 = vector.extract_strided_slice %27 {offsets = [0, 0], sizes = [4, 255], strides = [1, 1]} : vector<4x256xf32> to vector<4x255xf32>
    %40 = tpu.concatenate %38, %39 in 1 : vector<4x1xf32>, vector<4x255xf32> -> vector<4x256xf32>
    %41 = arith.select %22, %40, %37 : vector<4x256xi1>, vector<4x256xf32>
    %42 = vector.extract_strided_slice %1 {offsets = [0, 255], sizes = [4, 1], strides = [1, 1]} : vector<4x256xf32> to vector<4x1xf32>
    %43 = vector.extract_strided_slice %1 {offsets = [0, 0], sizes = [4, 255], strides = [1, 1]} : vector<4x256xf32> to vector<4x255xf32>
    %44 = tpu.concatenate %42, %43 in 1 : vector<4x1xf32>, vector<4x255xf32> -> vector<4x256xf32>
    %45 = vector.extract_strided_slice %1 {offsets = [0, 1], sizes = [4, 255], strides = [1, 1]} : vector<4x256xf32> to vector<4x255xf32>
    %46 = vector.extract_strided_slice %1 {offsets = [0, 0], sizes = [4, 1], strides = [1, 1]} : vector<4x256xf32> to vector<4x1xf32>
    %47 = tpu.concatenate %45, %46 in 1 : vector<4x255xf32>, vector<4x1xf32> -> vector<4x256xf32>
    %48 = arith.select %20, %47, %44 : vector<4x256xi1>, vector<4x256xf32>
    %49 = vector.extract_strided_slice %1 {offsets = [0, 1], sizes = [4, 255], strides = [1, 1]} : vector<4x256xf32> to vector<4x255xf32>
    %50 = vector.extract_strided_slice %1 {offsets = [0, 0], sizes = [4, 1], strides = [1, 1]} : vector<4x256xf32> to vector<4x1xf32>
    %51 = tpu.concatenate %49, %50 in 1 : vector<4x255xf32>, vector<4x1xf32> -> vector<4x256xf32>
    %52 = vector.extract_strided_slice %1 {offsets = [0, 255], sizes = [4, 1], strides = [1, 1]} : vector<4x256xf32> to vector<4x1xf32>
    %53 = vector.extract_strided_slice %1 {offsets = [0, 0], sizes = [4, 255], strides = [1, 1]} : vector<4x256xf32> to vector<4x255xf32>
    %54 = tpu.concatenate %52, %53 in 1 : vector<4x1xf32>, vector<4x255xf32> -> vector<4x256xf32>
    %55 = arith.select %22, %54, %51 : vector<4x256xi1>, vector<4x256xf32>
    %56 = vector.extract_strided_slice %1 {offsets = [0, 16], sizes = [4, 240], strides = [1, 1]} : vector<4x256xf32> to vector<4x240xf32>
    %57 = vector.extract_strided_slice %1 {offsets = [0, 224], sizes = [4, 16], strides = [1, 1]} : vector<4x256xf32> to vector<4x16xf32>
    %58 = tpu.concatenate %56, %57 in 1 : vector<4x240xf32>, vector<4x16xf32> -> vector<4x256xf32>
    %59 = vector.extract_strided_slice %58 {offsets = [0, 255], sizes = [4, 1], strides = [1, 1]} : vector<4x256xf32> to vector<4x1xf32>
    %60 = vector.extract_strided_slice %58 {offsets = [0, 0], sizes = [4, 255], strides = [1, 1]} : vector<4x256xf32> to vector<4x255xf32>
    %61 = tpu.concatenate %59, %60 in 1 : vector<4x1xf32>, vector<4x255xf32> -> vector<4x256xf32>
    %62 = vector.extract_strided_slice %58 {offsets = [0, 1], sizes = [4, 255], strides = [1, 1]} : vector<4x256xf32> to vector<4x255xf32>
    %63 = vector.extract_strided_slice %58 {offsets = [0, 0], sizes = [4, 1], strides = [1, 1]} : vector<4x256xf32> to vector<4x1xf32>
    %64 = tpu.concatenate %62, %63 in 1 : vector<4x255xf32>, vector<4x1xf32> -> vector<4x256xf32>
    %65 = arith.select %20, %64, %61 : vector<4x256xi1>, vector<4x256xf32>
    %66 = vector.extract_strided_slice %58 {offsets = [0, 1], sizes = [4, 255], strides = [1, 1]} : vector<4x256xf32> to vector<4x255xf32>
    %67 = vector.extract_strided_slice %58 {offsets = [0, 0], sizes = [4, 1], strides = [1, 1]} : vector<4x256xf32> to vector<4x1xf32>
    %68 = tpu.concatenate %66, %67 in 1 : vector<4x255xf32>, vector<4x1xf32> -> vector<4x256xf32>
    %69 = vector.extract_strided_slice %58 {offsets = [0, 255], sizes = [4, 1], strides = [1, 1]} : vector<4x256xf32> to vector<4x1xf32>
    %70 = vector.extract_strided_slice %58 {offsets = [0, 0], sizes = [4, 255], strides = [1, 1]} : vector<4x256xf32> to vector<4x255xf32>
    %71 = tpu.concatenate %69, %70 in 1 : vector<4x1xf32>, vector<4x255xf32> -> vector<4x256xf32>
    %72 = arith.select %22, %71, %68 : vector<4x256xi1>, vector<4x256xf32>
    %73 = tpu.concatenate %34, %27, %41, %48, %1, %55, %65, %58, %72 in 0 : vector<4x256xf32>, vector<4x256xf32>, vector<4x256xf32>, vector<4x256xf32>, vector<4x256xf32>, vector<4x256xf32>, vector<4x256xf32>, vector<4x256xf32>, vector<4x256xf32> -> vector<36x256xf32>
    %cst = arith.constant dense<0.000000e+00> : vector<4x256xf32>
    %74 = tpu.matmul %23, %73, %cst {dimension_numbers = #tpu.dot_dimension_numbers<[1], [0], [0], [1], [0, 0, 1, 1], [], []>, precision = #tpu.contract_precision<fp32>} : vector<4x36xf32>, vector<36x256xf32>, vector<4x256xf32> -> vector<4x256xf32>
    %75 = vector.broadcast %24 : vector<4x1xf32> to vector<4x256xf32>
    %76 = arith.addf %74, %75 : vector<4x256xf32>
    %cst_10 = arith.constant dense<0.000000e+00> : vector<4xf32>
    %77 = vector.multi_reduction <add>, %76, %cst_10 [1] : vector<4x256xf32> to vector<4xf32>
    %78 = vector.shape_cast %77 : vector<4xf32> to vector<4x1xf32>
    %cst_11 = arith.constant 2.560000e+02 : f32
    %79 = vector.broadcast %cst_11 : f32 to vector<4x1xf32>
    %80 = arith.divf %78, %79 : vector<4x1xf32>
    %81 = arith.mulf %76, %76 : vector<4x256xf32>
    %cst_12 = arith.constant dense<0.000000e+00> : vector<4xf32>
    %82 = vector.multi_reduction <add>, %81, %cst_12 [1] : vector<4x256xf32> to vector<4xf32>
    %83 = vector.shape_cast %82 : vector<4xf32> to vector<4x1xf32>
    %cst_13 = arith.constant 2.560000e+02 : f32
    %84 = vector.broadcast %cst_13 : f32 to vector<4x1xf32>
    %85 = arith.divf %83, %84 : vector<4x1xf32>
    %86 = arith.mulf %80, %80 : vector<4x1xf32>
    %87 = arith.subf %85, %86 : vector<4x1xf32>
    %cst_14 = arith.constant 0.000000e+00 : f32
    %88 = vector.broadcast %cst_14 : f32 to vector<4x1xf32>
    %89 = arith.maximumf %87, %88 : vector<4x1xf32>
    %90 = vector.broadcast %80 : vector<4x1xf32> to vector<4x256xf32>
    %91 = arith.subf %76, %90 : vector<4x256xf32>
    %cst_15 = arith.constant 9.99999974E-6 : f32
    %92 = vector.broadcast %cst_15 : f32 to vector<4x1xf32>
    %93 = arith.addf %89, %92 : vector<4x1xf32>
    %94 = math.rsqrt %93 : vector<4x1xf32>
    %95 = vector.broadcast %94 : vector<4x1xf32> to vector<4x256xf32>
    %96 = arith.mulf %91, %95 : vector<4x256xf32>
    %cst_16 = arith.constant 0.000000e+00 : f32
    %97 = vector.broadcast %cst_16 : f32 to vector<4x256xf32>
    %98 = arith.maximumf %96, %97 : vector<4x256xf32>
    %c0_17 = arith.constant 0 : index
    %c0_18 = arith.constant 0 : index
    %99 = vector.load %arg4[%c0_17, %c0_18] : memref<4x36xf32, #tpu.memory_space<vmem>>, vector<4x36xf32>
    %c0_19 = arith.constant 0 : index
    %c0_20 = arith.constant 0 : index
    %100 = vector.load %arg5[%c0_19, %c0_20] : memref<4x1xf32, #tpu.memory_space<vmem>>, vector<4x1xf32>
    %101 = vector.extract_strided_slice %98 {offsets = [0, 16], sizes = [4, 16], strides = [1, 1]} : vector<4x256xf32> to vector<4x16xf32>
    %102 = vector.extract_strided_slice %98 {offsets = [0, 0], sizes = [4, 240], strides = [1, 1]} : vector<4x256xf32> to vector<4x240xf32>
    %103 = tpu.concatenate %101, %102 in 1 : vector<4x16xf32>, vector<4x240xf32> -> vector<4x256xf32>
    %104 = vector.extract_strided_slice %103 {offsets = [0, 255], sizes = [4, 1], strides = [1, 1]} : vector<4x256xf32> to vector<4x1xf32>
    %105 = vector.extract_strided_slice %103 {offsets = [0, 0], sizes = [4, 255], strides = [1, 1]} : vector<4x256xf32> to vector<4x255xf32>
    %106 = tpu.concatenate %104, %105 in 1 : vector<4x1xf32>, vector<4x255xf32> -> vector<4x256xf32>
    %107 = vector.extract_strided_slice %103 {offsets = [0, 1], sizes = [4, 255], strides = [1, 1]} : vector<4x256xf32> to vector<4x255xf32>
    %108 = vector.extract_strided_slice %103 {offsets = [0, 0], sizes = [4, 1], strides = [1, 1]} : vector<4x256xf32> to vector<4x1xf32>
    %109 = tpu.concatenate %107, %108 in 1 : vector<4x255xf32>, vector<4x1xf32> -> vector<4x256xf32>
    %110 = arith.select %20, %109, %106 : vector<4x256xi1>, vector<4x256xf32>
    %111 = vector.extract_strided_slice %103 {offsets = [0, 1], sizes = [4, 255], strides = [1, 1]} : vector<4x256xf32> to vector<4x255xf32>
    %112 = vector.extract_strided_slice %103 {offsets = [0, 0], sizes = [4, 1], strides = [1, 1]} : vector<4x256xf32> to vector<4x1xf32>
    %113 = tpu.concatenate %111, %112 in 1 : vector<4x255xf32>, vector<4x1xf32> -> vector<4x256xf32>
    %114 = vector.extract_strided_slice %103 {offsets = [0, 255], sizes = [4, 1], strides = [1, 1]} : vector<4x256xf32> to vector<4x1xf32>
    %115 = vector.extract_strided_slice %103 {offsets = [0, 0], sizes = [4, 255], strides = [1, 1]} : vector<4x256xf32> to vector<4x255xf32>
    %116 = tpu.concatenate %114, %115 in 1 : vector<4x1xf32>, vector<4x255xf32> -> vector<4x256xf32>
    %117 = arith.select %22, %116, %113 : vector<4x256xi1>, vector<4x256xf32>
    %118 = vector.extract_strided_slice %98 {offsets = [0, 255], sizes = [4, 1], strides = [1, 1]} : vector<4x256xf32> to vector<4x1xf32>
    %119 = vector.extract_strided_slice %98 {offsets = [0, 0], sizes = [4, 255], strides = [1, 1]} : vector<4x256xf32> to vector<4x255xf32>
    %120 = tpu.concatenate %118, %119 in 1 : vector<4x1xf32>, vector<4x255xf32> -> vector<4x256xf32>
    %121 = vector.extract_strided_slice %98 {offsets = [0, 1], sizes = [4, 255], strides = [1, 1]} : vector<4x256xf32> to vector<4x255xf32>
    %122 = vector.extract_strided_slice %98 {offsets = [0, 0], sizes = [4, 1], strides = [1, 1]} : vector<4x256xf32> to vector<4x1xf32>
    %123 = tpu.concatenate %121, %122 in 1 : vector<4x255xf32>, vector<4x1xf32> -> vector<4x256xf32>
    %124 = arith.select %20, %123, %120 : vector<4x256xi1>, vector<4x256xf32>
    %125 = vector.extract_strided_slice %98 {offsets = [0, 1], sizes = [4, 255], strides = [1, 1]} : vector<4x256xf32> to vector<4x255xf32>
    %126 = vector.extract_strided_slice %98 {offsets = [0, 0], sizes = [4, 1], strides = [1, 1]} : vector<4x256xf32> to vector<4x1xf32>
    %127 = tpu.concatenate %125, %126 in 1 : vector<4x255xf32>, vector<4x1xf32> -> vector<4x256xf32>
    %128 = vector.extract_strided_slice %98 {offsets = [0, 255], sizes = [4, 1], strides = [1, 1]} : vector<4x256xf32> to vector<4x1xf32>
    %129 = vector.extract_strided_slice %98 {offsets = [0, 0], sizes = [4, 255], strides = [1, 1]} : vector<4x256xf32> to vector<4x255xf32>
    %130 = tpu.concatenate %128, %129 in 1 : vector<4x1xf32>, vector<4x255xf32> -> vector<4x256xf32>
    %131 = arith.select %22, %130, %127 : vector<4x256xi1>, vector<4x256xf32>
    %132 = vector.extract_strided_slice %98 {offsets = [0, 16], sizes = [4, 240], strides = [1, 1]} : vector<4x256xf32> to vector<4x240xf32>
    %133 = vector.extract_strided_slice %98 {offsets = [0, 224], sizes = [4, 16], strides = [1, 1]} : vector<4x256xf32> to vector<4x16xf32>
    %134 = tpu.concatenate %132, %133 in 1 : vector<4x240xf32>, vector<4x16xf32> -> vector<4x256xf32>
    %135 = vector.extract_strided_slice %134 {offsets = [0, 255], sizes = [4, 1], strides = [1, 1]} : vector<4x256xf32> to vector<4x1xf32>
    %136 = vector.extract_strided_slice %134 {offsets = [0, 0], sizes = [4, 255], strides = [1, 1]} : vector<4x256xf32> to vector<4x255xf32>
    %137 = tpu.concatenate %135, %136 in 1 : vector<4x1xf32>, vector<4x255xf32> -> vector<4x256xf32>
    %138 = vector.extract_strided_slice %134 {offsets = [0, 1], sizes = [4, 255], strides = [1, 1]} : vector<4x256xf32> to vector<4x255xf32>
    %139 = vector.extract_strided_slice %134 {offsets = [0, 0], sizes = [4, 1], strides = [1, 1]} : vector<4x256xf32> to vector<4x1xf32>
    %140 = tpu.concatenate %138, %139 in 1 : vector<4x255xf32>, vector<4x1xf32> -> vector<4x256xf32>
    %141 = arith.select %20, %140, %137 : vector<4x256xi1>, vector<4x256xf32>
    %142 = vector.extract_strided_slice %134 {offsets = [0, 1], sizes = [4, 255], strides = [1, 1]} : vector<4x256xf32> to vector<4x255xf32>
    %143 = vector.extract_strided_slice %134 {offsets = [0, 0], sizes = [4, 1], strides = [1, 1]} : vector<4x256xf32> to vector<4x1xf32>
    %144 = tpu.concatenate %142, %143 in 1 : vector<4x255xf32>, vector<4x1xf32> -> vector<4x256xf32>
    %145 = vector.extract_strided_slice %134 {offsets = [0, 255], sizes = [4, 1], strides = [1, 1]} : vector<4x256xf32> to vector<4x1xf32>
    %146 = vector.extract_strided_slice %134 {offsets = [0, 0], sizes = [4, 255], strides = [1, 1]} : vector<4x256xf32> to vector<4x255xf32>
    %147 = tpu.concatenate %145, %146 in 1 : vector<4x1xf32>, vector<4x255xf32> -> vector<4x256xf32>
    %148 = arith.select %22, %147, %144 : vector<4x256xi1>, vector<4x256xf32>
    %149 = tpu.concatenate %110, %103, %117, %124, %98, %131, %141, %134, %148 in 0 : vector<4x256xf32>, vector<4x256xf32>, vector<4x256xf32>, vector<4x256xf32>, vector<4x256xf32>, vector<4x256xf32>, vector<4x256xf32>, vector<4x256xf32>, vector<4x256xf32> -> vector<36x256xf32>
    %cst_21 = arith.constant dense<0.000000e+00> : vector<4x256xf32>
    %150 = tpu.matmul %99, %149, %cst_21 {dimension_numbers = #tpu.dot_dimension_numbers<[1], [0], [0], [1], [0, 0, 1, 1], [], []>, precision = #tpu.contract_precision<fp32>} : vector<4x36xf32>, vector<36x256xf32>, vector<4x256xf32> -> vector<4x256xf32>
    %151 = vector.broadcast %100 : vector<4x1xf32> to vector<4x256xf32>
    %152 = arith.addf %150, %151 : vector<4x256xf32>
    %cst_22 = arith.constant dense<0.000000e+00> : vector<4xf32>
    %153 = vector.multi_reduction <add>, %152, %cst_22 [1] : vector<4x256xf32> to vector<4xf32>
    %154 = vector.shape_cast %153 : vector<4xf32> to vector<4x1xf32>
    %cst_23 = arith.constant 2.560000e+02 : f32
    %155 = vector.broadcast %cst_23 : f32 to vector<4x1xf32>
    %156 = arith.divf %154, %155 : vector<4x1xf32>
    %157 = arith.mulf %152, %152 : vector<4x256xf32>
    %cst_24 = arith.constant dense<0.000000e+00> : vector<4xf32>
    %158 = vector.multi_reduction <add>, %157, %cst_24 [1] : vector<4x256xf32> to vector<4xf32>
    %159 = vector.shape_cast %158 : vector<4xf32> to vector<4x1xf32>
    %cst_25 = arith.constant 2.560000e+02 : f32
    %160 = vector.broadcast %cst_25 : f32 to vector<4x1xf32>
    %161 = arith.divf %159, %160 : vector<4x1xf32>
    %162 = arith.mulf %156, %156 : vector<4x1xf32>
    %163 = arith.subf %161, %162 : vector<4x1xf32>
    %cst_26 = arith.constant 0.000000e+00 : f32
    %164 = vector.broadcast %cst_26 : f32 to vector<4x1xf32>
    %165 = arith.maximumf %163, %164 : vector<4x1xf32>
    %166 = vector.broadcast %156 : vector<4x1xf32> to vector<4x256xf32>
    %167 = arith.subf %152, %166 : vector<4x256xf32>
    %cst_27 = arith.constant 9.99999974E-6 : f32
    %168 = vector.broadcast %cst_27 : f32 to vector<4x1xf32>
    %169 = arith.addf %165, %168 : vector<4x1xf32>
    %170 = math.rsqrt %169 : vector<4x1xf32>
    %171 = vector.broadcast %170 : vector<4x1xf32> to vector<4x256xf32>
    %172 = arith.mulf %167, %171 : vector<4x256xf32>
    %173 = arith.addf %1, %172 : vector<4x256xf32>
    %c0_28 = arith.constant 0 : index
    %c0_29 = arith.constant 0 : index
    %c0_30 = arith.constant 0 : index
    %174 = vector.load %arg6[%c0_28, %c0_29, %c0_30] : memref<1x4x256xf32, #tpu.memory_space<vmem>>, vector<1x4x256xf32>
    %175 = vector.shape_cast %174 : vector<1x4x256xf32> to vector<4x256xf32>
    %176 = vector.shape_cast %173 : vector<4x256xf32> to vector<1x4x256xf32>
    tpu.vector_store %arg6[%c0_28, %c0_29, %c0_30], %176 {strides = array<i32>} : memref<1x4x256xf32, #tpu.memory_space<vmem>>, vector<1x4x256xf32>,
    return
  }
  func.func @transform_0(%arg0: i32) -> (i32, i32, i32) {
    %c0_i32 = arith.constant 0 : i32
    %c0_i32_0 = arith.constant 0 : i32
    %c0_i32_1 = arith.constant 0 : i32
    return %arg0, %c0_i32, %c0_i32_0 : i32, i32, i32
  }
  func.func @transform_1(%arg0: i32) -> (i32, i32) {
    %c0_i32 = arith.constant 0 : i32
    %c0_i32_0 = arith.constant 0 : i32
    %c0_i32_1 = arith.constant 0 : i32
    return %c0_i32, %c0_i32_0 : i32, i32
  }
  func.func @transform_2(%arg0: i32) -> (i32, i32) {
    %c0_i32 = arith.constant 0 : i32
    %c0_i32_0 = arith.constant 0 : i32
    %c0_i32_1 = arith.constant 0 : i32
    return %c0_i32, %c0_i32_0 : i32, i32
  }
  func.func @transform_3(%arg0: i32) -> (i32, i32) {
    %c0_i32 = arith.constant 0 : i32
    %c0_i32_0 = arith.constant 0 : i32
    %c0_i32_1 = arith.constant 0 : i32
    return %c0_i32, %c0_i32_0 : i32, i32
  }
  func.func @transform_4(%arg0: i32) -> (i32, i32) {
    %c0_i32 = arith.constant 0 : i32
    %c0_i32_0 = arith.constant 0 : i32
    %c0_i32_1 = arith.constant 0 : i32
    return %c0_i32, %c0_i32_0 : i32, i32
  }
  func.func @transform_5(%arg0: i32) -> (i32, i32, i32) {
    %c0_i32 = arith.constant 0 : i32
    %c0_i32_0 = arith.constant 0 : i32
    %c0_i32_1 = arith.constant 0 : i32
    return %arg0, %c0_i32, %c0_i32_0 : i32, i32, i32
  }
}

</mosaic_0001>

<llo_original>
// kernel: res_block.1
$region0: #{res_block.1}
  #allocation0 [shape = 'u32[]', space=smem, size = 0x4, offset = 0x4, fixed_abs, tag = 'smem constant byte address 0x4 - core index']
  #allocation1 [shape = 'u32[144,128]{1,0:T(1,128)}', space=vmem, size = 0x12000, scoped, tag = 'internal scratch']
  %s0 = inlined_call_operand.vmem [shape: f32[2,4,256], index: 0, kind: input, shape index: {}]
  %s1 = inlined_call_operand.vmem [shape: f32[4,36], index: 1, kind: input, shape index: {}]
  %s2 = inlined_call_operand.vmem [shape: f32[4,1], index: 2, kind: input, shape index: {}]
  %s3 = inlined_call_operand.vmem [shape: f32[4,36], index: 3, kind: input, shape index: {}]
  %s4 = inlined_call_operand.vmem [shape: f32[4,1], index: 4, kind: input, shape index: {}]
  %s5 = inlined_call_operand.vmem [shape: f32[2,4,256], index: 5, kind: output, shape index: {}]
  %s6 = sld [smem:[#allocation0]]
  $region53: #{res_block.1} parent=0
    _
  %s8 = ssub.s32 1, %s6
  %s9 = scalar_select 0, %s8, %s6
  loop: start=0, step=1, limit=4
  $region2: #{res_block.1} parent=0 // loop_pre_header
    _
  $region3: #{res_block.1} parent=0 // loop_header
    %s11 = sphi 0, %s15
    %p12 = scmp.ge.s32.totalorder %s11, 4
    %s21 = sphi 0, %s23
    %s24 = sphi 0, %s21
    %s25 = sphi 0, %s24
    %s41 = sphi 0, %s25
    %s45 = sphi 0, %s45
    %s47 = sphi 0, %s45
    %s48 = sphi 0, %s47
    %s62 = sphi 0, %s48
    %s66 = sphi 0, %s66
    %s68 = sphi 0, %s66
    %s69 = sphi 0, %s68
    %s83 = sphi 0, %s69
    %s87 = sphi 0, %s87
    %s89 = sphi 0, %s87
    %s90 = sphi 0, %s89
    %s104 = sphi 0, %s90
    %s108 = sphi 0, %s108
    %s110 = sphi 0, %s108
    %s111 = sphi 0, %s110
    %s125 = sphi 0, %s111
    %s131 = sphi 0, %s133
    %s134 = sphi 0, %s131
    %s135 = sphi 0, %s134
    %s151 = sphi 0, %s135
  $region4: #{res_block.1} parent=0 // loop_header_branch
    %14 = sbr.rel (%p12) target = $region8
  $region5: #{res_block.1} parent=0 // loop_body
    %s16 = ssub.s32 %s11, 1
    %s17 = ssub.s32 %s11, 2
    %s18 = sadd.s32 %s11, 1
    %s19 = ssub.s32 %s11, %s18
    %p20 = scmp.eq.s32.totalorder %s19, 0
    %s22 = sadd.s32 %s21, 1
    %s23 = scalar_select %p20, %s21, %s22
    %p26 = pneg %p20
    %p27 = scmp.eq.s32.totalorder %s11, 1
    %p28 = por %p26, %p27
    %p29 = scmp.ne.s32.totalorder %s21, %s24
    %p30 = scmp.eq.s32.totalorder %s11, 0
    %p31 = por %p29, %p30
    %p32 = scmp.ne.s32.totalorder %s21, %s24
    %p33 = scmp.eq.s32.totalorder %s16, 1
    %p34 = por %p32, %p33
    %p35 = scmp.ne.s32.totalorder %s24, %s25
    %p36 = scmp.eq.s32.totalorder %s16, 0
    %p37 = por %p35, %p36
    %p38 = scmp.ne.s32.totalorder %s24, %s25
    %p39 = scmp.eq.s32.totalorder %s17, 1
    %p40 = por %p38, %p39
    %p42 = scmp.ne.s32.totalorder %s25, %s41
    %p43 = scmp.eq.s32.totalorder %s17, 0
    %p44 = por %p42, %p43
    %s46 = sadd.s32 %s45, 1
    %p49 = scmp.eq.s32.totalorder %s11, 1
    %p50 = scmp.ne.s32.totalorder %s45, %s47
    %p51 = scmp.eq.s32.totalorder %s11, 0
    %p52 = por %p50, %p51
    %p53 = scmp.ne.s32.totalorder %s45, %s47
    %p54 = scmp.eq.s32.totalorder %s16, 1
    %p55 = por %p53, %p54
    %p56 = scmp.ne.s32.totalorder %s47, %s48
    %p57 = scmp.eq.s32.totalorder %s16, 0
    %p58 = por %p56, %p57
    %p59 = scmp.ne.s32.totalorder %s47, %s48
    %p60 = scmp.eq.s32.totalorder %s17, 1
    %p61 = por %p59, %p60
    %p63 = scmp.ne.s32.totalorder %s48, %s62
    %p64 = scmp.eq.s32.totalorder %s17, 0
    %p65 = por %p63, %p64
    %s67 = sadd.s32 %s66, 1
    %p70 = scmp.eq.s32.totalorder %s11, 1
    %p71 = scmp.ne.s32.totalorder %s66, %s68
    %p72 = scmp.eq.s32.totalorder %s11, 0
    %p73 = por %p71, %p72
    %p74 = scmp.ne.s32.totalorder %s66, %s68
    %p75 = scmp.eq.s32.totalorder %s16, 1
    %p76 = por %p74, %p75
    %p77 = scmp.ne.s32.totalorder %s68, %s69
    %p78 = scmp.eq.s32.totalorder %s16, 0
    %p79 = por %p77, %p78
    %p80 = scmp.ne.s32.totalorder %s68, %s69
    %p81 = scmp.eq.s32.totalorder %s17, 1
    %p82 = por %p80, %p81
    %p84 = scmp.ne.s32.totalorder %s69, %s83
    %p85 = scmp.eq.s32.totalorder %s17, 0
    %p86 = por %p84, %p85
    %s88 = sadd.s32 %s87, 1
    %p91 = scmp.eq.s32.totalorder %s11, 1
    %p92 = scmp.ne.s32.totalorder %s87, %s89
    %p93 = scmp.eq.s32.totalorder %s11, 0
    %p94 = por %p92, %p93
    %p95 = scmp.ne.s32.totalorder %s87, %s89
    %p96 = scmp.eq.s32.totalorder %s16, 1
    %p97 = por %p95, %p96
    %p98 = scmp.ne.s32.totalorder %s89, %s90
    %p99 = scmp.eq.s32.totalorder %s16, 0
    %p100 = por %p98, %p99
    %p101 = scmp.ne.s32.totalorder %s89, %s90
    %p102 = scmp.eq.s32.totalorder %s17, 1
    %p103 = por %p101, %p102
    %p105 = scmp.ne.s32.totalorder %s90, %s104
    %p106 = scmp.eq.s32.totalorder %s17, 0
    %p107 = por %p105, %p106
    %s109 = sadd.s32 %s108, 1
    %p112 = scmp.eq.s32.totalorder %s11, 1
    %p113 = scmp.ne.s32.totalorder %s108, %s110
    %p114 = scmp.eq.s32.totalorder %s11, 0
    %p115 = por %p113, %p114
    %p116 = scmp.ne.s32.totalorder %s108, %s110
    %p117 = scmp.eq.s32.totalorder %s16, 1
    %p118 = por %p116, %p117
    %p119 = scmp.ne.s32.totalorder %s110, %s111
    %p120 = scmp.eq.s32.totalorder %s16, 0
    %p121 = por %p119, %p120
    %p122 = scmp.ne.s32.totalorder %s110, %s111
    %p123 = scmp.eq.s32.totalorder %s17, 1
    %p124 = por %p122, %p123
    %p126 = scmp.ne.s32.totalorder %s111, %s125
    %p127 = scmp.eq.s32.totalorder %s17, 0
    %p128 = por %p126, %p127
    %s129 = ssub.s32 %s11, %s18
    %p130 = scmp.eq.s32.totalorder %s129, 0
    %s132 = sadd.s32 %s131, 1
    %s133 = scalar_select %p130, %s131, %s132
    %p136 = pneg %p130
    %p137 = scmp.eq.s32.totalorder %s11, 1
    %p138 = por %p136, %p137
    %p139 = scmp.ne.s32.totalorder %s131, %s134
    %p140 = scmp.eq.s32.totalorder %s11, 0
    %p141 = por %p139, %p140
    %p142 = scmp.ne.s32.totalorder %s131, %s134
    %p143 = scmp.eq.s32.totalorder %s16, 1
    %p144 = por %p142, %p143
    %p145 = scmp.ne.s32.totalorder %s134, %s135
    %p146 = scmp.eq.s32.totalorder %s16, 0
    %p147 = por %p145, %p146
    %p148 = scmp.ne.s32.totalorder %s134, %s135
    %p149 = scmp.eq.s32.totalorder %s17, 1
    %p150 = por %p148, %p149
    %p152 = scmp.ne.s32.totalorder %s135, %s151
    %p153 = scmp.eq.s32.totalorder %s17, 0
    %p154 = por %p152, %p153
    %p155 = scmp.le.s32.totalorder 1, %s11
    %p156 = scmp.lt.s32.totalorder %s11, 3
    %p157 = pnand %p155, %p156
    %p158 = pneg %p157
    // Predicated region
    $region9: #{res_block.1} parent=5 // pred_check
      _
    $region10: #{res_block.1} parent=5 // pred_check_branch
      %160 = sbr.rel (%p157) target = $region12
    $region11: #{res_block.1} parent=5 // pred_region
      %s161 = ssub.s32 %s11, 1
      // Predicated region
      $region13: #{res_block.1} parent=11 // pred_check
        %p162 = pneg %p58
      $region14: #{res_block.1} parent=11 // pred_check_branch
        %164 = sbr.rel (%p162) target = $region16
      $region15: #{res_block.1} parent=11 // pred_region
        _
      $region16: #{res_block.1} parent=11 // pred_fallthru
        _
      // Predicated region
      $region17: #{res_block.1} parent=11 // pred_check
        %p165 = pneg %p79
      $region18: #{res_block.1} parent=11 // pred_check_branch
        %167 = sbr.rel (%p165) target = $region20
      $region19: #{res_block.1} parent=11 // pred_region
        _
      $region20: #{res_block.1} parent=11 // pred_fallthru
        _
      // Predicated region
      $region21: #{res_block.1} parent=11 // pred_check
        %p168 = pneg %p100
      $region22: #{res_block.1} parent=11 // pred_check_branch
        %170 = sbr.rel (%p168) target = $region24
      $region23: #{res_block.1} parent=11 // pred_region
        _
      $region24: #{res_block.1} parent=11 // pred_fallthru
        _
      // Predicated region
      $region25: #{res_block.1} parent=11 // pred_check
        %p171 = pneg %p121
      $region26: #{res_block.1} parent=11 // pred_check_branch
        %173 = sbr.rel (%p171) target = $region28
      $region27: #{res_block.1} parent=11 // pred_region
        _
      $region28: #{res_block.1} parent=11 // pred_fallthru
        _
    $region12: #{res_block.1} parent=5 // pred_fallthru
      _
    %p174 = scmp.lt.s32.totalorder %s11, 2
    // Predicated region
    $region29: #{res_block.1} parent=5 // pred_check
      %p175 = pneg %p174
    $region30: #{res_block.1} parent=5 // pred_check_branch
      %177 = sbr.rel (%p175) target = $region32
    $region31: #{res_block.1} parent=5 // pred_region
      // Predicated region
      $region33: #{res_block.1} parent=31 // pred_check
        %p178 = pneg %p31
      $region34: #{res_block.1} parent=31 // pred_check_branch
        %180 = sbr.rel (%p178) target = $region36
      $region35: #{res_block.1} parent=31 // pred_region
        %p181 = scmp.lt.s32.totalorder %s11, 1
        %s182 = scalar_select %p181, %s11, 1
        %s183 = smul.addr %s182, 2
        %s184 = smul.addr %s183, 4
        %s185 = scalar_lea.vmem %s0, %s184
      $region36: #{res_block.1} parent=31 // pred_fallthru
        _
    $region32: #{res_block.1} parent=5 // pred_fallthru
      _
    %p186 = scmp.le.s32.totalorder 1, %s11
    %p187 = scmp.lt.s32.totalorder %s11, 3
    %p188 = pnand %p186, %p187
    %p189 = pneg %p188
    // Predicated region
    $region37: #{res_block.1} parent=5 // pred_check
      _
    $region38: #{res_block.1} parent=5 // pred_check_branch
      %191 = sbr.rel (%p188) target = $region40
    $region39: #{res_block.1} parent=5 // pred_region
      %s192 = ssub.s32 %s11, 1
      %p193 = scmp.lt.s32.totalorder %s16, 1
      %s194 = scalar_select %p193, %s16, 1
      %s195 = smul.addr %s194, 2
      %s196 = smul.addr %s195, 4
      %s197 = scalar_lea.vmem %s0, %s196
      %p198 = pneg %p37
      %p199 = pneg %p34
      %p200 = pneg %p58
      %p201 = pneg %p55
      %p202 = pneg %p79
      %p203 = pneg %p76
      %p204 = pneg %p100
      %p205 = pneg %p97
      %p206 = pneg %p121
      %p207 = pneg %p118
      %p208 = pneg %p147
      %p209 = pneg %p144
      %p210 = scmp.lt.s32.totalorder %s16, 1
      %s211 = scalar_select %p210, %s16, 1
      %s212 = smul.addr %s211, 2
      %s213 = smul.addr %s212, 4
      %s214 = scalar_lea.vmem %s5, %s213
      %p215 = scmp.lt.s32.totalorder %s16, 1
      %s216 = scalar_select %p215, %s16, 1
      %s217 = smul.addr %s216, 2
      %s218 = smul.addr %s217, 4
      %s219 = scalar_lea.vmem %s0, %s218
      %p220 = scmp.lt.s32.totalorder %s16, 1
      %s221 = scalar_select %p220, %s16, 1
      %s222 = smul.addr %s221, 2
      %s223 = smul.addr %s222, 4
      %s224 = scalar_lea.vmem %s5, %s223
      %v225 = vld [vmem:[%s219] sm:$0xff]
      %v226 = vlaneseq
      %v227 = vand.u32 %v226, 127
      %v228 = vadd.s32 %v227, 128
      %vm229 = vcmp.lt.s32.totalorder %v227, 0
      %v230 = vsub.s32 0, %v227
      %v231 = vsel %vm229, %v230, %v227
      %v232 = vshrl.u32 %v231, 4
      %v233 = vand.u32 %v231, 15
      %v234 = vsub.s32 0, %v233
      %v235 = vsel %vm229, %v234, %v233
      %vm236 = vcmp.lt.s32.totalorder %v228, 0
      %v237 = vsub.s32 0, %v228
      %v238 = vsel %vm236, %v237, %v228
      %v239 = vshrl.u32 %v238, 4
      %v240 = vand.u32 %v238, 15
      %v241 = vsub.s32 0, %v240
      %v242 = vsel %vm236, %v241, %v240
      %vm243 = vcmp.ne.s32.totalorder %v235, 0
      %vm244 = vcmp.ne.s32.totalorder %v242, 0
      %vm245 = vcmp.lt.s32.totalorder %v235, 0
      %vm246 = vcmp.lt.s32.totalorder %v242, 0
      %vm247 = vmand %vm245, %vm243
      %vm248 = vmand %vm246, %vm244
      %v249 = vadd.s32 %v235, 16
      %v250 = vadd.s32 %v242, 16
      %v251 = vsel %vm247, %v249, %v235
      %v252 = vsel %vm248, %v250, %v242
      %vm253 = vcmp.eq.s32.totalorder %v251, 0
      %vm254 = vcmp.eq.s32.totalorder %v252, 0
      %vm255 = vcmp.eq.s32.totalorder %v251, 15
      %vm256 = vcmp.eq.s32.totalorder %v252, 15
      %v257 = vld [vmem:[%s1] sm:$0xf]
      %v258 = vld [vmem:[%s2] sm:$0xf]
      %260 = vrot.lane.b32.xlu0 %v225, 112
      %v261 = vpop.permute.xlu0 %260
      %v263 = vcombine.high %v225, %v225
      %264 = vrot.lane.b32.xlu0 %v225, 16
      %v265 = vpop.permute.xlu0 %264
      %266 = vrot.lane.b32.xlu0 %v263, 16
      %v267 = vpop.permute.xlu0 %266
      %vm268 = vcmask 130048
      %v269 = vsel %vm268, %v265, %v267
      %v271 = vsel %vm268, %v261, %v265
      %272 = vrot.lane.b32.xlu0 %v269, 1
      %v273 = vpop.permute.xlu0 %272
      %276 = vrot.lane.b32.xlu0 %v271, 1
      %v277 = vpop.permute.xlu0 %276
      %vm278 = vcmask 7168
      %v279 = vsel %vm278, %v277, %v273
      %v282 = vsel %vm278, %v273, %v277
      %283 = vrot.lane.b32.xlu0 %v271, 127
      %v284 = vpop.permute.xlu0 %283
      %285 = vrot.lane.b32.xlu0 %v269, 127
      %v286 = vpop.permute.xlu0 %285
      %vm287 = vcmask 1039360
      %v288 = vsel %vm287, %v284, %v286
      %v292 = vsel %vm287, %v286, %v284
      %v293 = vsel %vm253, %v288, %v282
      %v294 = vsel %vm254, %v292, %v279
      %v295 = vsel %vm255, %v282, %v288
      %v296 = vsel %vm256, %v279, %v292
      %297 = vrot.lane.b32.xlu0 %v263, 1
      %v298 = vpop.permute.xlu0 %297
      %300 = vrot.lane.b32.xlu0 %v225, 1
      %v301 = vpop.permute.xlu0 %300
      %v302 = vsel %vm278, %v301, %v298
      %v305 = vsel %vm278, %v298, %v301
      %306 = vrot.lane.b32.xlu0 %v225, 127
      %v307 = vpop.permute.xlu0 %306
      %308 = vrot.lane.b32.xlu0 %v263, 127
      %v309 = vpop.permute.xlu0 %308
      %v310 = vsel %vm287, %v307, %v309
      %v314 = vsel %vm287, %v309, %v307
      %v315 = vsel %vm253, %v310, %v305
      %v316 = vsel %vm254, %v314, %v302
      %v317 = vsel %vm255, %v305, %v310
      %v318 = vsel %vm256, %v302, %v314
      %319 = vrot.lane.b32.xlu0 %v263, 112
      %v320 = vpop.permute.xlu0 %319
      %vm321 = vcmask 916480
      %v322 = vsel %vm321, %v261, %v320
      %v325 = vsel %vm321, %v320, %v267
      %327 = vrot.lane.b32.xlu0 %v325, 1
      %v328 = vpop.permute.xlu0 %327
      %330 = vrot.lane.b32.xlu0 %v322, 1
      %v331 = vpop.permute.xlu0 %330
      %v332 = vsel %vm278, %v331, %v328
      %v335 = vsel %vm278, %v328, %v331
      %336 = vrot.lane.b32.xlu0 %v322, 127
      %v337 = vpop.permute.xlu0 %336
      %338 = vrot.lane.b32.xlu0 %v325, 127
      %v339 = vpop.permute.xlu0 %338
      %v340 = vsel %vm287, %v337, %v339
      %v344 = vsel %vm287, %v339, %v337
      %v345 = vsel %vm253, %v340, %v335
      %v346 = vsel %vm254, %v344, %v332
      %v347 = vsel %vm255, %v335, %v340
      %v348 = vsel %vm256, %v332, %v344
      %v349 = vrot.slane %v271, 4
      %v350 = vrot.slane %v269, 4
      %v355 = vrot.slane %v315, 4
      %v356 = vrot.slane %v316, 4
      %v362 = vrot.slane %v317, 4
      %v363 = vrot.slane %v318, 4
      %v366 = vrot.slane %v322, 4
      %v367 = vrot.slane %v325, 4
      %vm370 = vcmask 1043456
      %v371 = vsel %vm370, %v293, %v349
      %v372 = vsel %vm370, %v294, %v350
      %v373 = vsel %vm370, %v295, %v355
      %v374 = vsel %vm370, %v296, %v356
      %v375 = vsel %vm370, %v225, %v362
      %v376 = vsel %vm370, %v263, %v363
      %v377 = vsel %vm370, %v345, %v366
      %v378 = vsel %vm370, %v346, %v367
      %380 = vset.pattern.permute.xlu0 0
      %381 = vperm.xlu0 %380, %v258
      %v382 = vpop.permute.xlu0 %381
      %vm384 = vcmask 293888
      %v386 = vsel %vm384, %v257, 0
      %v389 = vsel %vm370, %v347, 0
      %v392 = vsel %vm370, %v348, 0
      %v394 = vand.u32 %v372, 4294901760
      %395 = vmatprep.subr.mxu0 %v394
      %v396 = vand.u32 %v371, 4294901760
      %397 = vmatpush1.msra.mxu0 %v396
      %v398 = vand.u32 %v374, 4294901760
      %399 = vmatprep.subr.mxu0 %v398
      %v400 = vand.u32 %v373, 4294901760
      %401 = vmatpush1.msra.mxu0 %v400
      %v402 = vand.u32 %v376, 4294901760
      %403 = vmatprep.subr.mxu0 %v402
      %v404 = vand.u32 %v375, 4294901760
      %405 = vmatpush1.msra.mxu0 %v404
      %v406 = vand.u32 %v378, 4294901760
      %407 = vmatprep.subr.mxu0 %v406
      %v408 = vand.u32 %v377, 4294901760
      %409 = vmatpush1.msra.mxu0 %v408
      %v410 = vand.u32 %v392, 4294901760
      %411 = vmatprep.subr.mxu0 %v410
      %v412 = vand.u32 %v389, 4294901760
      %413 = vmatpush1.msra.mxu0 %v412
      %414 = vmatprep.subr.mxu0 0.0
      %415 = vmatpush1.msra.mxu0 0.0
      %416 = vmatprep.subr.mxu0 0.0
      %417 = vmatpush1.msra.mxu0 0.0
      %418 = vmatprep.subr.mxu0 0.0
      %419 = vmatpush1.msra.mxu0 0.0
      %420 = vmatprep.subr.mxu0 0.0
      %421 = vmatpush1.msra.mxu0 0.0
      %422 = vmatprep.subr.mxu0 0.0
      %423 = vmatpush1.msra.mxu0 0.0
      %424 = vmatprep.subr.mxu0 0.0
      %425 = vmatpush1.msra.mxu0 0.0
      %426 = vmatprep.subr.mxu0 0.0
      %427 = vmatpush1.msra.mxu0 0.0
      %428 = vmatprep.subr.mxu0 0.0
      %429 = vmatpush1.msra.mxu0 0.0
      %430 = vmatprep.subr.mxu0 0.0
      %431 = vmatpush1.msra.mxu0 0.0
      %432 = vmatprep.subr.mxu0 0.0
      %433 = vmatpush1.msra.mxu0 0.0
      %434 = vmatprep.subr.mxu0 0.0
      %435 = vmatpush1.msra.mxu0 0.0
      %436 = vmatprep.subr.mxu0 0.0
      %437 = vmatpush1.msra.mxu0 0.0
      %438 = vmatprep.subr.mxu0 0.0
      %439 = vmatpush1.msra.mxu0 0.0
      %440 = vmatprep.subr.mxu0 0.0
      %441 = vmatpush1.msra.mxu0 0.0
      %442 = vmatprep.subr.mxu0 0.0
      %443 = vmatpush1.msra.mxu0 0.0
      %444 = vmatprep.subr.mxu0 0.0
      %445 = vmatpush1.msra.mxu0 0.0
      %446 = vmatprep.subr.mxu0 0.0
      %447 = vmatpush1.msra.mxu0 0.0
      %448 = vmatprep.subr.mxu0 0.0
      %449 = vmatpush1.msra.mxu0 0.0
      %450 = vmatprep.subr.mxu0 0.0
      %451 = vmatpush1.msra.mxu0 0.0
      %452 = vmatprep.subr.mxu0 0.0
      %453 = vmatpush1.msra.mxu0 0.0
      %454 = vmatprep.subr.mxu0 0.0
      %455 = vmatpush1.msra.mxu0 0.0
      %456 = vmatprep.subr.mxu0 0.0
      %457 = vmatpush1.msra.mxu0 0.0
      %458 = vmatprep.subr.mxu0 0.0
      %459 = vmatpush1.msra.mxu0 0.0
      %460 = vmatprep.subr.mxu0 0.0
      %461 = vmatpush1.msra.mxu0 0.0
      %462 = vmatprep.subr.mxu0 0.0
      %463 = vmatpush1.msra.mxu0 0.0
      %464 = vmatprep.subr.mxu0 0.0
      %465 = vmatpush1.msra.mxu0 0.0
      %466 = vmatprep.subr.mxu0 0.0
      %467 = vmatpush1.msra.mxu0 0.0
      %468 = vmatprep.mubr.f32.mxu0 0.0
      %v469 = vand.u32 %v386, 4294901760
      %v470 = vsub.f32 %v386, %v469
      %v471 = vand.u32 %v470, 4294901760
      %v472 = vsub.f32 %v470, %v471
      %v473 = vand.u32 %v472, 4294901760
      %474 = vmatmul.mubr.f32.gmra.mrb[0].mxu0 %v473
      %v475 = vpop.f32.mrb[0].mxu0
      %v476 = vadd.f32 %v382, %v475
      %v477 = vpop.f32.mrb[0].mxu0
      %v478 = vadd.f32 %v382, %v477
      %479 = vdwg.mxu0
      %v480 = vand.u32 %v372, 4294901760
      %v481 = vsub.f32 %v372, %v480
      %v482 = vand.u32 %v481, 4294901760
      %v483 = vsub.f32 %v481, %v482
      %v484 = vand.u32 %v483, 4294901760
      %485 = vmatprep.subr.mxu0 %v484
      %v486 = vand.u32 %v371, 4294901760
      %v487 = vsub.f32 %v371, %v486
      %v488 = vand.u32 %v487, 4294901760
      %v489 = vsub.f32 %v487, %v488
      %v490 = vand.u32 %v489, 4294901760
      %491 = vmatpush1.msra.mxu0 %v490
      %v492 = vand.u32 %v374, 4294901760
      %v493 = vsub.f32 %v374, %v492
      %v494 = vand.u32 %v493, 4294901760
      %v495 = vsub.f32 %v493, %v494
      %v496 = vand.u32 %v495, 4294901760
      %497 = vmatprep.subr.mxu0 %v496
      %v498 = vand.u32 %v373, 4294901760
      %v499 = vsub.f32 %v373, %v498
      %v500 = vand.u32 %v499, 4294901760
      %v501 = vsub.f32 %v499, %v500
      %v502 = vand.u32 %v501, 4294901760
      %503 = vmatpush1.msra.mxu0 %v502
      %v504 = vand.u32 %v376, 4294901760
      %v505 = vsub.f32 %v376, %v504
      %v506 = vand.u32 %v505, 4294901760
      %v507 = vsub.f32 %v505, %v506
      %v508 = vand.u32 %v507, 4294901760
      %509 = vmatprep.subr.mxu0 %v508
      %v510 = vand.u32 %v375, 4294901760
      %v511 = vsub.f32 %v375, %v510
      %v512 = vand.u32 %v511, 4294901760
      %v513 = vsub.f32 %v511, %v512
      %v514 = vand.u32 %v513, 4294901760
      %515 = vmatpush1.msra.mxu0 %v514
      %v516 = vand.u32 %v378, 4294901760
      %v517 = vsub.f32 %v378, %v516
      %v518 = vand.u32 %v517, 4294901760
      %v519 = vsub.f32 %v517, %v518
      %v520 = vand.u32 %v519, 4294901760
      %521 = vmatprep.subr.mxu0 %v520
      %v522 = vand.u32 %v377, 4294901760
      %v523 = vsub.f32 %v377, %v522
      %v524 = vand.u32 %v523, 4294901760
      %v525 = vsub.f32 %v523, %v524
      %v526 = vand.u32 %v525, 4294901760
      %527 = vmatpush1.msra.mxu0 %v526
      %v528 = vand.u32 %v392, 4294901760
      %v529 = vsub.f32 %v392, %v528
      %v530 = vand.u32 %v529, 4294901760
      %v531 = vsub.f32 %v529, %v530
      %v532 = vand.u32 %v531, 4294901760
      %533 = vmatprep.subr.mxu0 %v532
      %v534 = vand.u32 %v389, 4294901760
      %v535 = vsub.f32 %v389, %v534
      %v536 = vand.u32 %v535, 4294901760
      %v537 = vsub.f32 %v535, %v536
      %v538 = vand.u32 %v537, 4294901760
      %539 = vmatpush1.msra.mxu0 %v538
      %540 = vmatprep.subr.mxu0 0.0
      %541 = vmatpush1.msra.mxu0 0.0
      %542 = vmatprep.subr.mxu0 0.0
      %543 = vmatpush1.msra.mxu0 0.0
      %544 = vmatprep.subr.mxu0 0.0
      %545 = vmatpush1.msra.mxu0 0.0
      %546 = vmatprep.subr.mxu0 0.0
      %547 = vmatpush1.msra.mxu0 0.0
      %548 = vmatprep.subr.mxu0 0.0
      %549 = vmatpush1.msra.mxu0 0.0
      %550 = vmatprep.subr.mxu0 0.0
      %551 = vmatpush1.msra.mxu0 0.0
      %552 = vmatprep.subr.mxu0 0.0
      %553 = vmatpush1.msra.mxu0 0.0
      %554 = vmatprep.subr.mxu0 0.0
      %555 = vmatpush1.msra.mxu0 0.0
      %556 = vmatprep.subr.mxu0 0.0
      %557 = vmatpush1.msra.mxu0 0.0
      %558 = vmatprep.subr.mxu0 0.0
      %559 = vmatpush1.msra.mxu0 0.0
      %560 = vmatprep.subr.mxu0 0.0
      %561 = vmatpush1.msra.mxu0 0.0
      %562 = vmatprep.subr.mxu0 0.0
      %563 = vmatpush1.msra.mxu0 0.0
      %564 = vmatprep.subr.mxu0 0.0
      %565 = vmatpush1.msra.mxu0 0.0
      %566 = vmatprep.subr.mxu0 0.0
      %567 = vmatpush1.msra.mxu0 0.0
      %568 = vmatprep.subr.mxu0 0.0
      %569 = vmatpush1.msra.mxu0 0.0
      %570 = vmatprep.subr.mxu0 0.0
      %571 = vmatpush1.msra.mxu0 0.0
      %572 = vmatprep.subr.mxu0 0.0
      %573 = vmatpush1.msra.mxu0 0.0
      %574 = vmatprep.subr.mxu0 0.0
      %575 = vmatpush1.msra.mxu0 0.0
      %576 = vmatprep.subr.mxu0 0.0
      %577 = vmatpush1.msra.mxu0 0.0
      %578 = vmatprep.subr.mxu0 0.0
      %579 = vmatpush1.msra.mxu0 0.0
      %580 = vmatprep.subr.mxu0 0.0
      %581 = vmatpush1.msra.mxu0 0.0
      %582 = vmatprep.subr.mxu0 0.0
      %583 = vmatpush1.msra.mxu0 0.0
      %584 = vmatprep.subr.mxu0 0.0
      %585 = vmatpush1.msra.mxu0 0.0
      %586 = vmatprep.subr.mxu0 0.0
      %587 = vmatpush1.msra.mxu0 0.0
      %588 = vmatprep.subr.mxu0 0.0
      %589 = vmatpush1.msra.mxu0 0.0
      %590 = vmatprep.subr.mxu0 0.0
      %591 = vmatpush1.msra.mxu0 0.0
      %592 = vmatprep.subr.mxu0 0.0
      %593 = vmatpush1.msra.mxu0 0.0
      %594 = vmatprep.mubr.f32.mxu0 0.0
      %v595 = vand.u32 %v386, 4294901760
      %596 = vmatmul.mubr.f32.gmra.mrb[0].mxu0 %v595
      %v597 = vpop.f32.mrb[0].mxu0
      %v598 = vadd.f32 %v476, %v597
      %v599 = vpop.f32.mrb[0].mxu0
      %v600 = vadd.f32 %v478, %v599
      %601 = vdwg.mxu0
      %v602 = vand.u32 %v372, 4294901760
      %v603 = vsub.f32 %v372, %v602
      %604 = vmatprep.subr.mxu0 %v603
      %v605 = vand.u32 %v371, 4294901760
      %v606 = vsub.f32 %v371, %v605
      %607 = vmatpush1.msra.mxu0 %v606
      %v608 = vand.u32 %v374, 4294901760
      %v609 = vsub.f32 %v374, %v608
      %610 = vmatprep.subr.mxu0 %v609
      %v611 = vand.u32 %v373, 4294901760
      %v612 = vsub.f32 %v373, %v611
      %613 = vmatpush1.msra.mxu0 %v612
      %v614 = vand.u32 %v376, 4294901760
      %v615 = vsub.f32 %v376, %v614
      %616 = vmatprep.subr.mxu0 %v615
      %v617 = vand.u32 %v375, 4294901760
      %v618 = vsub.f32 %v375, %v617
      %619 = vmatpush1.msra.mxu0 %v618
      %v620 = vand.u32 %v378, 4294901760
      %v621 = vsub.f32 %v378, %v620
      %622 = vmatprep.subr.mxu0 %v621
      %v623 = vand.u32 %v377, 4294901760
      %v624 = vsub.f32 %v377, %v623
      %625 = vmatpush1.msra.mxu0 %v624
      %v626 = vand.u32 %v392, 4294901760
      %v627 = vsub.f32 %v392, %v626
      %628 = vmatprep.subr.mxu0 %v627
      %v629 = vand.u32 %v389, 4294901760
      %v630 = vsub.f32 %v389, %v629
      %631 = vmatpush1.msra.mxu0 %v630
      %632 = vmatprep.subr.mxu0 0.0
      %633 = vmatpush1.msra.mxu0 0.0
      %634 = vmatprep.subr.mxu0 0.0
      %635 = vmatpush1.msra.mxu0 0.0
      %636 = vmatprep.subr.mxu0 0.0
      %637 = vmatpush1.msra.mxu0 0.0
      %638 = vmatprep.subr.mxu0 0.0
      %639 = vmatpush1.msra.mxu0 0.0
      %640 = vmatprep.subr.mxu0 0.0
      %641 = vmatpush1.msra.mxu0 0.0
      %642 = vmatprep.subr.mxu0 0.0
      %643 = vmatpush1.msra.mxu0 0.0
      %644 = vmatprep.subr.mxu0 0.0
      %645 = vmatpush1.msra.mxu0 0.0
      %646 = vmatprep.subr.mxu0 0.0
      %647 = vmatpush1.msra.mxu0 0.0
      %648 = vmatprep.subr.mxu0 0.0
      %649 = vmatpush1.msra.mxu0 0.0
      %650 = vmatprep.subr.mxu0 0.0
      %651 = vmatpush1.msra.mxu0 0.0
      %652 = vmatprep.subr.mxu0 0.0
      %653 = vmatpush1.msra.mxu0 0.0
      %654 = vmatprep.subr.mxu0 0.0
      %655 = vmatpush1.msra.mxu0 0.0
      %656 = vmatprep.subr.mxu0 0.0
      %657 = vmatpush1.msra.mxu0 0.0
      %658 = vmatprep.subr.mxu0 0.0
      %659 = vmatpush1.msra.mxu0 0.0
      %660 = vmatprep.subr.mxu0 0.0
      %661 = vmatpush1.msra.mxu0 0.0
      %662 = vmatprep.subr.mxu0 0.0
      %663 = vmatpush1.msra.mxu0 0.0
      %664 = vmatprep.subr.mxu0 0.0
      %665 = vmatpush1.msra.mxu0 0.0
      %666 = vmatprep.subr.mxu0 0.0
      %667 = vmatpush1.msra.mxu0 0.0
      %668 = vmatprep.subr.mxu0 0.0
      %669 = vmatpush1.msra.mxu0 0.0
      %670 = vmatprep.subr.mxu0 0.0
      %671 = vmatpush1.msra.mxu0 0.0
      %672 = vmatprep.subr.mxu0 0.0
      %673 = vmatpush1.msra.mxu0 0.0
      %674 = vmatprep.subr.mxu0 0.0
      %675 = vmatpush1.msra.mxu0 0.0
      %676 = vmatprep.subr.mxu0 0.0
      %677 = vmatpush1.msra.mxu0 0.0
      %678 = vmatprep.subr.mxu0 0.0
      %679 = vmatpush1.msra.mxu0 0.0
      %680 = vmatprep.subr.mxu0 0.0
      %681 = vmatpush1.msra.mxu0 0.0
      %682 = vmatprep.subr.mxu0 0.0
      %683 = vmatpush1.msra.mxu0 0.0
      %684 = vmatprep.subr.mxu0 0.0
      %685 = vmatpush1.msra.mxu0 0.0
      %686 = vmatprep.mubr.f32.mxu0 0.0
      %v687 = vand.u32 %v386, 4294901760
      %v688 = vsub.f32 %v386, %v687
      %689 = vmatmul.mubr.f32.gmra.mrb[0].mxu0 %v688
      %v690 = vpop.f32.mrb[0].mxu0
      %v691 = vadd.f32 %v598, %v690
      %v692 = vpop.f32.mrb[0].mxu0
      %v693 = vadd.f32 %v600, %v692
      %694 = vdwg.mxu0
      %v695 = vand.u32 %v372, 4294901760
      %696 = vmatprep.subr.mxu0 %v695
      %v697 = vand.u32 %v371, 4294901760
      %698 = vmatpush1.msra.mxu0 %v697
      %v699 = vand.u32 %v374, 4294901760
      %700 = vmatprep.subr.mxu0 %v699
      %v701 = vand.u32 %v373, 4294901760
      %702 = vmatpush1.msra.mxu0 %v701
      %v703 = vand.u32 %v376, 4294901760
      %704 = vmatprep.subr.mxu0 %v703
      %v705 = vand.u32 %v375, 4294901760
      %706 = vmatpush1.msra.mxu0 %v705
      %v707 = vand.u32 %v378, 4294901760
      %708 = vmatprep.subr.mxu0 %v707
      %v709 = vand.u32 %v377, 4294901760
      %710 = vmatpush1.msra.mxu0 %v709
      %v711 = vand.u32 %v392, 4294901760
      %712 = vmatprep.subr.mxu0 %v711
      %v713 = vand.u32 %v389, 4294901760
      %714 = vmatpush1.msra.mxu0 %v713
      %715 = vmatprep.subr.mxu0 0.0
      %716 = vmatpush1.msra.mxu0 0.0
      %717 = vmatprep.subr.mxu0 0.0
      %718 = vmatpush1.msra.mxu0 0.0
      %719 = vmatprep.subr.mxu0 0.0
      %720 = vmatpush1.msra.mxu0 0.0
      %721 = vmatprep.subr.mxu0 0.0
      %722 = vmatpush1.msra.mxu0 0.0
      %723 = vmatprep.subr.mxu0 0.0
      %724 = vmatpush1.msra.mxu0 0.0
      %725 = vmatprep.subr.mxu0 0.0
      %726 = vmatpush1.msra.mxu0 0.0
      %727 = vmatprep.subr.mxu0 0.0
      %728 = vmatpush1.msra.mxu0 0.0
      %729 = vmatprep.subr.mxu0 0.0
      %730 = vmatpush1.msra.mxu0 0.0
      %731 = vmatprep.subr.mxu0 0.0
      %732 = vmatpush1.msra.mxu0 0.0
      %733 = vmatprep.subr.mxu0 0.0
      %734 = vmatpush1.msra.mxu0 0.0
      %735 = vmatprep.subr.mxu0 0.0
      %736 = vmatpush1.msra.mxu0 0.0
      %737 = vmatprep.subr.mxu0 0.0
      %738 = vmatpush1.msra.mxu0 0.0
      %739 = vmatprep.subr.mxu0 0.0
      %740 = vmatpush1.msra.mxu0 0.0
      %741 = vmatprep.subr.mxu0 0.0
      %742 = vmatpush1.msra.mxu0 0.0
      %743 = vmatprep.subr.mxu0 0.0
      %744 = vmatpush1.msra.mxu0 0.0
      %745 = vmatprep.subr.mxu0 0.0
      %746 = vmatpush1.msra.mxu0 0.0
      %747 = vmatprep.subr.mxu0 0.0
      %748 = vmatpush1.msra.mxu0 0.0
      %749 = vmatprep.subr.mxu0 0.0
      %750 = vmatpush1.msra.mxu0 0.0
      %751 = vmatprep.subr.mxu0 0.0
      %752 = vmatpush1.msra.mxu0 0.0
      %753 = vmatprep.subr.mxu0 0.0
      %754 = vmatpush1.msra.mxu0 0.0
      %755 = vmatprep.subr.mxu0 0.0
      %756 = vmatpush1.msra.mxu0 0.0
      %757 = vmatprep.subr.mxu0 0.0
      %758 = vmatpush1.msra.mxu0 0.0
      %759 = vmatprep.subr.mxu0 0.0
      %760 = vmatpush1.msra.mxu0 0.0
      %761 = vmatprep.subr.mxu0 0.0
      %762 = vmatpush1.msra.mxu0 0.0
      %763 = vmatprep.subr.mxu0 0.0
      %764 = vmatpush1.msra.mxu0 0.0
      %765 = vmatprep.subr.mxu0 0.0
      %766 = vmatpush1.msra.mxu0 0.0
      %767 = vmatprep.subr.mxu0 0.0
      %768 = vmatpush1.msra.mxu0 0.0
      %769 = vmatprep.mubr.f32.mxu0 0.0
      %v770 = vand.u32 %v386, 4294901760
      %v771 = vsub.f32 %v386, %v770
      %v772 = vand.u32 %v771, 4294901760
      %773 = vmatmul.mubr.f32.gmra.mrb[0].mxu0 %v772
      %v774 = vpop.f32.mrb[0].mxu0
      %v775 = vadd.f32 %v691, %v774
      %v776 = vpop.f32.mrb[0].mxu0
      %v777 = vadd.f32 %v693, %v776
      %778 = vdwg.mxu0
      %v779 = vand.u32 %v372, 4294901760
      %v780 = vsub.f32 %v372, %v779
      %v781 = vand.u32 %v780, 4294901760
      %782 = vmatprep.subr.mxu0 %v781
      %v783 = vand.u32 %v371, 4294901760
      %v784 = vsub.f32 %v371, %v783
      %v785 = vand.u32 %v784, 4294901760
      %786 = vmatpush1.msra.mxu0 %v785
      %v787 = vand.u32 %v374, 4294901760
      %v788 = vsub.f32 %v374, %v787
      %v789 = vand.u32 %v788, 4294901760
      %790 = vmatprep.subr.mxu0 %v789
      %v791 = vand.u32 %v373, 4294901760
      %v792 = vsub.f32 %v373, %v791
      %v793 = vand.u32 %v792, 4294901760
      %794 = vmatpush1.msra.mxu0 %v793
      %v795 = vand.u32 %v376, 4294901760
      %v796 = vsub.f32 %v376, %v795
      %v797 = vand.u32 %v796, 4294901760
      %798 = vmatprep.subr.mxu0 %v797
      %v799 = vand.u32 %v375, 4294901760
      %v800 = vsub.f32 %v375, %v799
      %v801 = vand.u32 %v800, 4294901760
      %802 = vmatpush1.msra.mxu0 %v801
      %v803 = vand.u32 %v378, 4294901760
      %v804 = vsub.f32 %v378, %v803
      %v805 = vand.u32 %v804, 4294901760
      %806 = vmatprep.subr.mxu0 %v805
      %v807 = vand.u32 %v377, 4294901760
      %v808 = vsub.f32 %v377, %v807
      %v809 = vand.u32 %v808, 4294901760
      %810 = vmatpush1.msra.mxu0 %v809
      %v811 = vand.u32 %v392, 4294901760
      %v812 = vsub.f32 %v392, %v811
      %v813 = vand.u32 %v812, 4294901760
      %814 = vmatprep.subr.mxu0 %v813
      %v815 = vand.u32 %v389, 4294901760
      %v816 = vsub.f32 %v389, %v815
      %v817 = vand.u32 %v816, 4294901760
      %818 = vmatpush1.msra.mxu0 %v817
      %819 = vmatprep.subr.mxu0 0.0
      %820 = vmatpush1.msra.mxu0 0.0
      %821 = vmatprep.subr.mxu0 0.0
      %822 = vmatpush1.msra.mxu0 0.0
      %823 = vmatprep.subr.mxu0 0.0
      %824 = vmatpush1.msra.mxu0 0.0
      %825 = vmatprep.subr.mxu0 0.0
      %826 = vmatpush1.msra.mxu0 0.0
      %827 = vmatprep.subr.mxu0 0.0
      %828 = vmatpush1.msra.mxu0 0.0
      %829 = vmatprep.subr.mxu0 0.0
      %830 = vmatpush1.msra.mxu0 0.0
      %831 = vmatprep.subr.mxu0 0.0
      %832 = vmatpush1.msra.mxu0 0.0
      %833 = vmatprep.subr.mxu0 0.0
      %834 = vmatpush1.msra.mxu0 0.0
      %835 = vmatprep.subr.mxu0 0.0
      %836 = vmatpush1.msra.mxu0 0.0
      %837 = vmatprep.subr.mxu0 0.0
      %838 = vmatpush1.msra.mxu0 0.0
      %839 = vmatprep.subr.mxu0 0.0
      %840 = vmatpush1.msra.mxu0 0.0
      %841 = vmatprep.subr.mxu0 0.0
      %842 = vmatpush1.msra.mxu0 0.0
      %843 = vmatprep.subr.mxu0 0.0
      %844 = vmatpush1.msra.mxu0 0.0
      %845 = vmatprep.subr.mxu0 0.0
      %846 = vmatpush1.msra.mxu0 0.0
      %847 = vmatprep.subr.mxu0 0.0
      %848 = vmatpush1.msra.mxu0 0.0
      %849 = vmatprep.subr.mxu0 0.0
      %850 = vmatpush1.msra.mxu0 0.0
      %851 = vmatprep.subr.mxu0 0.0
      %852 = vmatpush1.msra.mxu0 0.0
      %853 = vmatprep.subr.mxu0 0.0
      %854 = vmatpush1.msra.mxu0 0.0
      %855 = vmatprep.subr.mxu0 0.0
      %856 = vmatpush1.msra.mxu0 0.0
      %857 = vmatprep.subr.mxu0 0.0
      %858 = vmatpush1.msra.mxu0 0.0
      %859 = vmatprep.subr.mxu0 0.0
      %860 = vmatpush1.msra.mxu0 0.0
      %861 = vmatprep.subr.mxu0 0.0
      %862 = vmatpush1.msra.mxu0 0.0
      %863 = vmatprep.subr.mxu0 0.0
      %864 = vmatpush1.msra.mxu0 0.0
      %865 = vmatprep.subr.mxu0 0.0
      %866 = vmatpush1.msra.mxu0 0.0
      %867 = vmatprep.subr.mxu0 0.0
      %868 = vmatpush1.msra.mxu0 0.0
      %869 = vmatprep.subr.mxu0 0.0
      %870 = vmatpush1.msra.mxu0 0.0
      %871 = vmatprep.subr.mxu0 0.0
      %872 = vmatpush1.msra.mxu0 0.0
      %873 = vmatprep.mubr.f32.mxu0 0.0
      %v874 = vand.u32 %v386, 4294901760
      %875 = vmatmul.mubr.f32.gmra.mrb[0].mxu0 %v874
      %v876 = vpop.f32.mrb[0].mxu0
      %v877 = vadd.f32 %v775, %v876
      %v878 = vpop.f32.mrb[0].mxu0
      %v879 = vadd.f32 %v777, %v878
      %880 = vdwg.mxu0
      %v881 = vand.u32 %v372, 4294901760
      %882 = vmatprep.subr.mxu0 %v881
      %v883 = vand.u32 %v371, 4294901760
      %884 = vmatpush1.msra.mxu0 %v883
      %v885 = vand.u32 %v374, 4294901760
      %886 = vmatprep.subr.mxu0 %v885
      %v887 = vand.u32 %v373, 4294901760
      %888 = vmatpush1.msra.mxu0 %v887
      %v889 = vand.u32 %v376, 4294901760
      %890 = vmatprep.subr.mxu0 %v889
      %v891 = vand.u32 %v375, 4294901760
      %892 = vmatpush1.msra.mxu0 %v891
      %v893 = vand.u32 %v378, 4294901760
      %894 = vmatprep.subr.mxu0 %v893
      %v895 = vand.u32 %v377, 4294901760
      %896 = vmatpush1.msra.mxu0 %v895
      %v897 = vand.u32 %v392, 4294901760
      %898 = vmatprep.subr.mxu0 %v897
      %v899 = vand.u32 %v389, 4294901760
      %900 = vmatpush1.msra.mxu0 %v899
      %901 = vmatprep.subr.mxu0 0.0
      %902 = vmatpush1.msra.mxu0 0.0
      %903 = vmatprep.subr.mxu0 0.0
      %904 = vmatpush1.msra.mxu0 0.0
      %905 = vmatprep.subr.mxu0 0.0
      %906 = vmatpush1.msra.mxu0 0.0
      %907 = vmatprep.subr.mxu0 0.0
      %908 = vmatpush1.msra.mxu0 0.0
      %909 = vmatprep.subr.mxu0 0.0
      %910 = vmatpush1.msra.mxu0 0.0
      %911 = vmatprep.subr.mxu0 0.0
      %912 = vmatpush1.msra.mxu0 0.0
      %913 = vmatprep.subr.mxu0 0.0
      %914 = vmatpush1.msra.mxu0 0.0
      %915 = vmatprep.subr.mxu0 0.0
      %916 = vmatpush1.msra.mxu0 0.0
      %917 = vmatprep.subr.mxu0 0.0
      %918 = vmatpush1.msra.mxu0 0.0
      %919 = vmatprep.subr.mxu0 0.0
      %920 = vmatpush1.msra.mxu0 0.0
      %921 = vmatprep.subr.mxu0 0.0
      %922 = vmatpush1.msra.mxu0 0.0
      %923 = vmatprep.subr.mxu0 0.0
      %924 = vmatpush1.msra.mxu0 0.0
      %925 = vmatprep.subr.mxu0 0.0
      %926 = vmatpush1.msra.mxu0 0.0
      %927 = vmatprep.subr.mxu0 0.0
      %928 = vmatpush1.msra.mxu0 0.0
      %929 = vmatprep.subr.mxu0 0.0
      %930 = vmatpush1.msra.mxu0 0.0
      %931 = vmatprep.subr.mxu0 0.0
      %932 = vmatpush1.msra.mxu0 0.0
      %933 = vmatprep.subr.mxu0 0.0
      %934 = vmatpush1.msra.mxu0 0.0
      %935 = vmatprep.subr.mxu0 0.0
      %936 = vmatpush1.msra.mxu0 0.0
      %937 = vmatprep.subr.mxu0 0.0
      %938 = vmatpush1.msra.mxu0 0.0
      %939 = vmatprep.subr.mxu0 0.0
      %940 = vmatpush1.msra.mxu0 0.0
      %941 = vmatprep.subr.mxu0 0.0
      %942 = vmatpush1.msra.mxu0 0.0
      %943 = vmatprep.subr.mxu0 0.0
      %944 = vmatpush1.msra.mxu0 0.0
      %945 = vmatprep.subr.mxu0 0.0
      %946 = vmatpush1.msra.mxu0 0.0
      %947 = vmatprep.subr.mxu0 0.0
      %948 = vmatpush1.msra.mxu0 0.0
      %949 = vmatprep.subr.mxu0 0.0
      %950 = vmatpush1.msra.mxu0 0.0
      %951 = vmatprep.subr.mxu0 0.0
      %952 = vmatpush1.msra.mxu0 0.0
      %953 = vmatprep.subr.mxu0 0.0
      %954 = vmatpush1.msra.mxu0 0.0
      %955 = vmatprep.mubr.f32.mxu0 0.0
      %v956 = vand.u32 %v386, 4294901760
      %957 = vmatmul.mubr.f32.gmra.mrb[0].mxu0 %v956
      %v958 = vpop.f32.mrb[0].mxu0
      %v959 = vadd.f32 %v877, %v958
      %v960 = vpop.f32.mrb[0].mxu0
      %v961 = vadd.f32 %v879, %v960
      %962 = vdwg.mxu0
      %v963 = vsel %vm370, %v959, 0.0
      %v964 = vsel %vm370, %v961, 0.0
      %v965 = vadd.f32 %v963, %v964
      %966 = vadd.xlane.f32.xlu0 %v965
      %v967 = vpop.xlane.xlu0 %966
      %v968 = vrcp.pop 256.0
      %v969 = vmul.f32 %v967, %v968
      %v970 = vmul.f32 %v959, %v959
      %v971 = vmul.f32 %v961, %v961
      %v972 = vsel %vm370, %v970, 0.0
      %v973 = vsel %vm370, %v971, 0.0
      %v974 = vadd.f32 %v972, %v973
      %975 = vadd.xlane.f32.xlu0 %v974
      %v976 = vpop.xlane.xlu0 %975
      %v977 = vmul.f32 %v976, %v968
      %v978 = vmul.f32 %v969, %v969
      %v979 = vsub.f32 %v977, %v978
      %v980 = vmax.f32 %v979, 0.0
      %v981 = vsub.f32 %v959, %v969
      %v982 = vsub.f32 %v961, %v969
      %v983 = vadd.f32 %v980, 1e-05
      %v984 = vrsqrt.pop %v983
      %v985 = vmul.f32 %v981, %v984
      %v986 = vmul.f32 %v982, %v984
      %v987 = vmax.f32 %v985, 0.0
      %v988 = vmax.f32 %v986, 0.0
      %v989 = vld [vmem:[%s3] sm:$0xf]
      %v990 = vld [vmem:[%s4] sm:$0xf]
      %992 = vrot.lane.b32.xlu0 %v987, 112
      %v993 = vpop.permute.xlu0 %992
      %996 = vrot.lane.b32.xlu0 %v987, 16
      %v997 = vpop.permute.xlu0 %996
      %998 = vrot.lane.b32.xlu0 %v988, 16
      %v999 = vpop.permute.xlu0 %998
      %v1000 = vsel %vm268, %v997, %v999
      %v1002 = vsel %vm268, %v993, %v997
      %1003 = vrot.lane.b32.xlu0 %v1000, 1
      %v1004 = vpop.permute.xlu0 %1003
      %1007 = vrot.lane.b32.xlu0 %v1002, 1
      %v1008 = vpop.permute.xlu0 %1007
      %v1009 = vsel %vm278, %v1008, %v1004
      %v1012 = vsel %vm278, %v1004, %v1008
      %1013 = vrot.lane.b32.xlu0 %v1002, 127
      %v1014 = vpop.permute.xlu0 %1013
      %1015 = vrot.lane.b32.xlu0 %v1000, 127
      %v1016 = vpop.permute.xlu0 %1015
      %v1017 = vsel %vm287, %v1014, %v1016
      %v1021 = vsel %vm287, %v1016, %v1014
      %v1022 = vsel %vm253, %v1017, %v1012
      %v1023 = vsel %vm254, %v1021, %v1009
      %v1024 = vsel %vm255, %v1012, %v1017
      %v1025 = vsel %vm256, %v1009, %v1021
      %1026 = vrot.lane.b32.xlu0 %v988, 1
      %v1027 = vpop.permute.xlu0 %1026
      %1029 = vrot.lane.b32.xlu0 %v987, 1
      %v1030 = vpop.permute.xlu0 %1029
      %v1031 = vsel %vm278, %v1030, %v1027
      %v1034 = vsel %vm278, %v1027, %v1030
      %1035 = vrot.lane.b32.xlu0 %v987, 127
      %v1036 = vpop.permute.xlu0 %1035
      %1037 = vrot.lane.b32.xlu0 %v988, 127
      %v1038 = vpop.permute.xlu0 %1037
      %v1039 = vsel %vm287, %v1036, %v1038
      %v1043 = vsel %vm287, %v1038, %v1036
      %v1044 = vsel %vm253, %v1039, %v1034
      %v1045 = vsel %vm254, %v1043, %v1031
      %v1046 = vsel %vm255, %v1034, %v1039
      %v1047 = vsel %vm256, %v1031, %v1043
      %1048 = vrot.lane.b32.xlu0 %v988, 112
      %v1049 = vpop.permute.xlu0 %1048
      %v1050 = vsel %vm321, %v993, %v1049
      %v1053 = vsel %vm321, %v1049, %v999
      %1055 = vrot.lane.b32.xlu0 %v1053, 1
      %v1056 = vpop.permute.xlu0 %1055
      %1058 = vrot.lane.b32.xlu0 %v1050, 1
      %v1059 = vpop.permute.xlu0 %1058
      %v1060 = vsel %vm278, %v1059, %v1056
      %v1063 = vsel %vm278, %v1056, %v1059
      %1064 = vrot.lane.b32.xlu0 %v1050, 127
      %v1065 = vpop.permute.xlu0 %1064
      %1066 = vrot.lane.b32.xlu0 %v1053, 127
      %v1067 = vpop.permute.xlu0 %1066
      %v1068 = vsel %vm287, %v1065, %v1067
      %v1072 = vsel %vm287, %v1067, %v1065
      %v1073 = vsel %vm253, %v1068, %v1063
      %v1074 = vsel %vm254, %v1072, %v1060
      %v1075 = vsel %vm255, %v1063, %v1068
      %v1076 = vsel %vm256, %v1060, %v1072
      %v1077 = vrot.slane %v1002, 4
      %v1078 = vrot.slane %v1000, 4
      %v1083 = vrot.slane %v1044, 4
      %v1084 = vrot.slane %v1045, 4
      %v1089 = vrot.slane %v1046, 4
      %v1090 = vrot.slane %v1047, 4
      %v1093 = vrot.slane %v1050, 4
      %v1094 = vrot.slane %v1053, 4
      %v1097 = vsel %vm370, %v1022, %v1077
      %v1098 = vsel %vm370, %v1023, %v1078
      %v1099 = vsel %vm370, %v1024, %v1083
      %v1100 = vsel %vm370, %v1025, %v1084
      %v1101 = vsel %vm370, %v987, %v1089
      %v1102 = vsel %vm370, %v988, %v1090
      %v1103 = vsel %vm370, %v1073, %v1093
      %v1104 = vsel %vm370, %v1074, %v1094
      %1106 = vset.pattern.permute.xlu0 0
      %1107 = vperm.xlu0 %1106, %v990
      %v1108 = vpop.permute.xlu0 %1107
      %v1111 = vsel %vm384, %v989, 0
      %v1114 = vsel %vm370, %v1075, 0
      %v1117 = vsel %vm370, %v1076, 0
      %v1119 = vand.u32 %v1098, 4294901760
      %1120 = vmatprep.subr.mxu0 %v1119
      %v1121 = vand.u32 %v1097, 4294901760
      %1122 = vmatpush1.msra.mxu0 %v1121
      %v1123 = vand.u32 %v1100, 4294901760
      %1124 = vmatprep.subr.mxu0 %v1123
      %v1125 = vand.u32 %v1099, 4294901760
      %1126 = vmatpush1.msra.mxu0 %v1125
      %v1127 = vand.u32 %v1102, 4294901760
      %1128 = vmatprep.subr.mxu0 %v1127
      %v1129 = vand.u32 %v1101, 4294901760
      %1130 = vmatpush1.msra.mxu0 %v1129
      %v1131 = vand.u32 %v1104, 4294901760
      %1132 = vmatprep.subr.mxu0 %v1131
      %v1133 = vand.u32 %v1103, 4294901760
      %1134 = vmatpush1.msra.mxu0 %v1133
      %v1135 = vand.u32 %v1117, 4294901760
      %1136 = vmatprep.subr.mxu0 %v1135
      %v1137 = vand.u32 %v1114, 4294901760
      %1138 = vmatpush1.msra.mxu0 %v1137
      %1139 = vmatprep.subr.mxu0 0.0
      %1140 = vmatpush1.msra.mxu0 0.0
      %1141 = vmatprep.subr.mxu0 0.0
      %1142 = vmatpush1.msra.mxu0 0.0
      %1143 = vmatprep.subr.mxu0 0.0
      %1144 = vmatpush1.msra.mxu0 0.0
      %1145 = vmatprep.subr.mxu0 0.0
      %1146 = vmatpush1.msra.mxu0 0.0
      %1147 = vmatprep.subr.mxu0 0.0
      %1148 = vmatpush1.msra.mxu0 0.0
      %1149 = vmatprep.subr.mxu0 0.0
      %1150 = vmatpush1.msra.mxu0 0.0
      %1151 = vmatprep.subr.mxu0 0.0
      %1152 = vmatpush1.msra.mxu0 0.0
      %1153 = vmatprep.subr.mxu0 0.0
      %1154 = vmatpush1.msra.mxu0 0.0
      %1155 = vmatprep.subr.mxu0 0.0
      %1156 = vmatpush1.msra.mxu0 0.0
      %1157 = vmatprep.subr.mxu0 0.0
      %1158 = vmatpush1.msra.mxu0 0.0
      %1159 = vmatprep.subr.mxu0 0.0
      %1160 = vmatpush1.msra.mxu0 0.0
      %1161 = vmatprep.subr.mxu0 0.0
      %1162 = vmatpush1.msra.mxu0 0.0
      %1163 = vmatprep.subr.mxu0 0.0
      %1164 = vmatpush1.msra.mxu0 0.0
      %1165 = vmatprep.subr.mxu0 0.0
      %1166 = vmatpush1.msra.mxu0 0.0
      %1167 = vmatprep.subr.mxu0 0.0
      %1168 = vmatpush1.msra.mxu0 0.0
      %1169 = vmatprep.subr.mxu0 0.0
      %1170 = vmatpush1.msra.mxu0 0.0
      %1171 = vmatprep.subr.mxu0 0.0
      %1172 = vmatpush1.msra.mxu0 0.0
      %1173 = vmatprep.subr.mxu0 0.0
      %1174 = vmatpush1.msra.mxu0 0.0
      %1175 = vmatprep.subr.mxu0 0.0
      %1176 = vmatpush1.msra.mxu0 0.0
      %1177 = vmatprep.subr.mxu0 0.0
      %1178 = vmatpush1.msra.mxu0 0.0
      %1179 = vmatprep.subr.mxu0 0.0
      %1180 = vmatpush1.msra.mxu0 0.0
      %1181 = vmatprep.subr.mxu0 0.0
      %1182 = vmatpush1.msra.mxu0 0.0
      %1183 = vmatprep.subr.mxu0 0.0
      %1184 = vmatpush1.msra.mxu0 0.0
      %1185 = vmatprep.subr.mxu0 0.0
      %1186 = vmatpush1.msra.mxu0 0.0
      %1187 = vmatprep.subr.mxu0 0.0
      %1188 = vmatpush1.msra.mxu0 0.0
      %1189 = vmatprep.subr.mxu0 0.0
      %1190 = vmatpush1.msra.mxu0 0.0
      %1191 = vmatprep.subr.mxu0 0.0
      %1192 = vmatpush1.msra.mxu0 0.0
      %1193 = vmatprep.mubr.f32.mxu0 0.0
      %v1194 = vand.u32 %v1111, 4294901760
      %v1195 = vsub.f32 %v1111, %v1194
      %v1196 = vand.u32 %v1195, 4294901760
      %v1197 = vsub.f32 %v1195, %v1196
      %v1198 = vand.u32 %v1197, 4294901760
      %1199 = vmatmul.mubr.f32.gmra.mrb[0].mxu0 %v1198
      %v1200 = vpop.f32.mrb[0].mxu0
      %v1201 = vadd.f32 %v1108, %v1200
      %v1202 = vpop.f32.mrb[0].mxu0
      %v1203 = vadd.f32 %v1108, %v1202
      %1204 = vdwg.mxu0
      %v1205 = vand.u32 %v1098, 4294901760
      %v1206 = vsub.f32 %v1098, %v1205
      %v1207 = vand.u32 %v1206, 4294901760
      %v1208 = vsub.f32 %v1206, %v1207
      %v1209 = vand.u32 %v1208, 4294901760
      %1210 = vmatprep.subr.mxu0 %v1209
      %v1211 = vand.u32 %v1097, 4294901760
      %v1212 = vsub.f32 %v1097, %v1211
      %v1213 = vand.u32 %v1212, 4294901760
      %v1214 = vsub.f32 %v1212, %v1213
      %v1215 = vand.u32 %v1214, 4294901760
      %1216 = vmatpush1.msra.mxu0 %v1215
      %v1217 = vand.u32 %v1100, 4294901760
      %v1218 = vsub.f32 %v1100, %v1217
      %v1219 = vand.u32 %v1218, 4294901760
      %v1220 = vsub.f32 %v1218, %v1219
      %v1221 = vand.u32 %v1220, 4294901760
      %1222 = vmatprep.subr.mxu0 %v1221
      %v1223 = vand.u32 %v1099, 4294901760
      %v1224 = vsub.f32 %v1099, %v1223
      %v1225 = vand.u32 %v1224, 4294901760
      %v1226 = vsub.f32 %v1224, %v1225
      %v1227 = vand.u32 %v1226, 4294901760
      %1228 = vmatpush1.msra.mxu0 %v1227
      %v1229 = vand.u32 %v1102, 4294901760
      %v1230 = vsub.f32 %v1102, %v1229
      %v1231 = vand.u32 %v1230, 4294901760
      %v1232 = vsub.f32 %v1230, %v1231
      %v1233 = vand.u32 %v1232, 4294901760
      %1234 = vmatprep.subr.mxu0 %v1233
      %v1235 = vand.u32 %v1101, 4294901760
      %v1236 = vsub.f32 %v1101, %v1235
      %v1237 = vand.u32 %v1236, 4294901760
      %v1238 = vsub.f32 %v1236, %v1237
      %v1239 = vand.u32 %v1238, 4294901760
      %1240 = vmatpush1.msra.mxu0 %v1239
      %v1241 = vand.u32 %v1104, 4294901760
      %v1242 = vsub.f32 %v1104, %v1241
      %v1243 = vand.u32 %v1242, 4294901760
      %v1244 = vsub.f32 %v1242, %v1243
      %v1245 = vand.u32 %v1244, 4294901760
      %1246 = vmatprep.subr.mxu0 %v1245
      %v1247 = vand.u32 %v1103, 4294901760
      %v1248 = vsub.f32 %v1103, %v1247
      %v1249 = vand.u32 %v1248, 4294901760
      %v1250 = vsub.f32 %v1248, %v1249
      %v1251 = vand.u32 %v1250, 4294901760
      %1252 = vmatpush1.msra.mxu0 %v1251
      %v1253 = vand.u32 %v1117, 4294901760
      %v1254 = vsub.f32 %v1117, %v1253
      %v1255 = vand.u32 %v1254, 4294901760
      %v1256 = vsub.f32 %v1254, %v1255
      %v1257 = vand.u32 %v1256, 4294901760
      %1258 = vmatprep.subr.mxu0 %v1257
      %v1259 = vand.u32 %v1114, 4294901760
      %v1260 = vsub.f32 %v1114, %v1259
      %v1261 = vand.u32 %v1260, 4294901760
      %v1262 = vsub.f32 %v1260, %v1261
      %v1263 = vand.u32 %v1262, 4294901760
      %1264 = vmatpush1.msra.mxu0 %v1263
      %1265 = vmatprep.subr.mxu0 0.0
      %1266 = vmatpush1.msra.mxu0 0.0
      %1267 = vmatprep.subr.mxu0 0.0
      %1268 = vmatpush1.msra.mxu0 0.0
      %1269 = vmatprep.subr.mxu0 0.0
      %1270 = vmatpush1.msra.mxu0 0.0
      %1271 = vmatprep.subr.mxu0 0.0
      %1272 = vmatpush1.msra.mxu0 0.0
      %1273 = vmatprep.subr.mxu0 0.0
      %1274 = vmatpush1.msra.mxu0 0.0
      %1275 = vmatprep.subr.mxu0 0.0
      %1276 = vmatpush1.msra.mxu0 0.0
      %1277 = vmatprep.subr.mxu0 0.0
      %1278 = vmatpush1.msra.mxu0 0.0
      %1279 = vmatprep.subr.mxu0 0.0
      %1280 = vmatpush1.msra.mxu0 0.0
      %1281 = vmatprep.subr.mxu0 0.0
      %1282 = vmatpush1.msra.mxu0 0.0
      %1283 = vmatprep.subr.mxu0 0.0
      %1284 = vmatpush1.msra.mxu0 0.0
      %1285 = vmatprep.subr.mxu0 0.0
      %1286 = vmatpush1.msra.mxu0 0.0
      %1287 = vmatprep.subr.mxu0 0.0
      %1288 = vmatpush1.msra.mxu0 0.0
      %1289 = vmatprep.subr.mxu0 0.0
      %1290 = vmatpush1.msra.mxu0 0.0
      %1291 = vmatprep.subr.mxu0 0.0
      %1292 = vmatpush1.msra.mxu0 0.0
      %1293 = vmatprep.subr.mxu0 0.0
      %1294 = vmatpush1.msra.mxu0 0.0
      %1295 = vmatprep.subr.mxu0 0.0
      %1296 = vmatpush1.msra.mxu0 0.0
      %1297 = vmatprep.subr.mxu0 0.0
      %1298 = vmatpush1.msra.mxu0 0.0
      %1299 = vmatprep.subr.mxu0 0.0
      %1300 = vmatpush1.msra.mxu0 0.0
      %1301 = vmatprep.subr.mxu0 0.0
      %1302 = vmatpush1.msra.mxu0 0.0
      %1303 = vmatprep.subr.mxu0 0.0
      %1304 = vmatpush1.msra.mxu0 0.0
      %1305 = vmatprep.subr.mxu0 0.0
      %1306 = vmatpush1.msra.mxu0 0.0
      %1307 = vmatprep.subr.mxu0 0.0
      %1308 = vmatpush1.msra.mxu0 0.0
      %1309 = vmatprep.subr.mxu0 0.0
      %1310 = vmatpush1.msra.mxu0 0.0
      %1311 = vmatprep.subr.mxu0 0.0
      %1312 = vmatpush1.msra.mxu0 0.0
      %1313 = vmatprep.subr.mxu0 0.0
      %1314 = vmatpush1.msra.mxu0 0.0
      %1315 = vmatprep.subr.mxu0 0.0
      %1316 = vmatpush1.msra.mxu0 0.0
      %1317 = vmatprep.subr.mxu0 0.0
      %1318 = vmatpush1.msra.mxu0 0.0
      %1319 = vmatprep.mubr.f32.mxu0 0.0
      %v1320 = vand.u32 %v1111, 4294901760
      %1321 = vmatmul.mubr.f32.gmra.mrb[0].mxu0 %v1320
      %v1322 = vpop.f32.mrb[0].mxu0
      %v1323 = vadd.f32 %v1201, %v1322
      %v1324 = vpop.f32.mrb[0].mxu0
      %v1325 = vadd.f32 %v1203, %v1324
      %1326 = vdwg.mxu0
      %v1327 = vand.u32 %v1098, 4294901760
      %v1328 = vsub.f32 %v1098, %v1327
      %1329 = vmatprep.subr.mxu0 %v1328
      %v1330 = vand.u32 %v1097, 4294901760
      %v1331 = vsub.f32 %v1097, %v1330
      %1332 = vmatpush1.msra.mxu0 %v1331
      %v1333 = vand.u32 %v1100, 4294901760
      %v1334 = vsub.f32 %v1100, %v1333
      %1335 = vmatprep.subr.mxu0 %v1334
      %v1336 = vand.u32 %v1099, 4294901760
      %v1337 = vsub.f32 %v1099, %v1336
      %1338 = vmatpush1.msra.mxu0 %v1337
      %v1339 = vand.u32 %v1102, 4294901760
      %v1340 = vsub.f32 %v1102, %v1339
      %1341 = vmatprep.subr.mxu0 %v1340
      %v1342 = vand.u32 %v1101, 4294901760
      %v1343 = vsub.f32 %v1101, %v1342
      %1344 = vmatpush1.msra.mxu0 %v1343
      %v1345 = vand.u32 %v1104, 4294901760
      %v1346 = vsub.f32 %v1104, %v1345
      %1347 = vmatprep.subr.mxu0 %v1346
      %v1348 = vand.u32 %v1103, 4294901760
      %v1349 = vsub.f32 %v1103, %v1348
      %1350 = vmatpush1.msra.mxu0 %v1349
      %v1351 = vand.u32 %v1117, 4294901760
      %v1352 = vsub.f32 %v1117, %v1351
      %1353 = vmatprep.subr.mxu0 %v1352
      %v1354 = vand.u32 %v1114, 4294901760
      %v1355 = vsub.f32 %v1114, %v1354
      %1356 = vmatpush1.msra.mxu0 %v1355
      %1357 = vmatprep.subr.mxu0 0.0
      %1358 = vmatpush1.msra.mxu0 0.0
      %1359 = vmatprep.subr.mxu0 0.0
      %1360 = vmatpush1.msra.mxu0 0.0
      %1361 = vmatprep.subr.mxu0 0.0
      %1362 = vmatpush1.msra.mxu0 0.0
      %1363 = vmatprep.subr.mxu0 0.0
      %1364 = vmatpush1.msra.mxu0 0.0
      %1365 = vmatprep.subr.mxu0 0.0
      %1366 = vmatpush1.msra.mxu0 0.0
      %1367 = vmatprep.subr.mxu0 0.0
      %1368 = vmatpush1.msra.mxu0 0.0
      %1369 = vmatprep.subr.mxu0 0.0
      %1370 = vmatpush1.msra.mxu0 0.0
      %1371 = vmatprep.subr.mxu0 0.0
      %1372 = vmatpush1.msra.mxu0 0.0
      %1373 = vmatprep.subr.mxu0 0.0
      %1374 = vmatpush1.msra.mxu0 0.0
      %1375 = vmatprep.subr.mxu0 0.0
      %1376 = vmatpush1.msra.mxu0 0.0
      %1377 = vmatprep.subr.mxu0 0.0
      %1378 = vmatpush1.msra.mxu0 0.0
      %1379 = vmatprep.subr.mxu0 0.0
      %1380 = vmatpush1.msra.mxu0 0.0
      %1381 = vmatprep.subr.mxu0 0.0
      %1382 = vmatpush1.msra.mxu0 0.0
      %1383 = vmatprep.subr.mxu0 0.0
      %1384 = vmatpush1.msra.mxu0 0.0
      %1385 = vmatprep.subr.mxu0 0.0
      %1386 = vmatpush1.msra.mxu0 0.0
      %1387 = vmatprep.subr.mxu0 0.0
      %1388 = vmatpush1.msra.mxu0 0.0
      %1389 = vmatprep.subr.mxu0 0.0
      %1390 = vmatpush1.msra.mxu0 0.0
      %1391 = vmatprep.subr.mxu0 0.0
      %1392 = vmatpush1.msra.mxu0 0.0
      %1393 = vmatprep.subr.mxu0 0.0
      %1394 = vmatpush1.msra.mxu0 0.0
      %1395 = vmatprep.subr.mxu0 0.0
      %1396 = vmatpush1.msra.mxu0 0.0
      %1397 = vmatprep.subr.mxu0 0.0
      %1398 = vmatpush1.msra.mxu0 0.0
      %1399 = vmatprep.subr.mxu0 0.0
      %1400 = vmatpush1.msra.mxu0 0.0
      %1401 = vmatprep.subr.mxu0 0.0
      %1402 = vmatpush1.msra.mxu0 0.0
      %1403 = vmatprep.subr.mxu0 0.0
      %1404 = vmatpush1.msra.mxu0 0.0
      %1405 = vmatprep.subr.mxu0 0.0
      %1406 = vmatpush1.msra.mxu0 0.0
      %1407 = vmatprep.subr.mxu0 0.0
      %1408 = vmatpush1.msra.mxu0 0.0
      %1409 = vmatprep.subr.mxu0 0.0
      %1410 = vmatpush1.msra.mxu0 0.0
      %1411 = vmatprep.mubr.f32.mxu0 0.0
      %v1412 = vand.u32 %v1111, 4294901760
      %v1413 = vsub.f32 %v1111, %v1412
      %1414 = vmatmul.mubr.f32.gmra.mrb[0].mxu0 %v1413
      %v1415 = vpop.f32.mrb[0].mxu0
      %v1416 = vadd.f32 %v1323, %v1415
      %v1417 = vpop.f32.mrb[0].mxu0
      %v1418 = vadd.f32 %v1325, %v1417
      %1419 = vdwg.mxu0
      %v1420 = vand.u32 %v1098, 4294901760
      %1421 = vmatprep.subr.mxu0 %v1420
      %v1422 = vand.u32 %v1097, 4294901760
      %1423 = vmatpush1.msra.mxu0 %v1422
      %v1424 = vand.u32 %v1100, 4294901760
      %1425 = vmatprep.subr.mxu0 %v1424
      %v1426 = vand.u32 %v1099, 4294901760
      %1427 = vmatpush1.msra.mxu0 %v1426
      %v1428 = vand.u32 %v1102, 4294901760
      %1429 = vmatprep.subr.mxu0 %v1428
      %v1430 = vand.u32 %v1101, 4294901760
      %1431 = vmatpush1.msra.mxu0 %v1430
      %v1432 = vand.u32 %v1104, 4294901760
      %1433 = vmatprep.subr.mxu0 %v1432
      %v1434 = vand.u32 %v1103, 4294901760
      %1435 = vmatpush1.msra.mxu0 %v1434
      %v1436 = vand.u32 %v1117, 4294901760
      %1437 = vmatprep.subr.mxu0 %v1436
      %v1438 = vand.u32 %v1114, 4294901760
      %1439 = vmatpush1.msra.mxu0 %v1438
      %1440 = vmatprep.subr.mxu0 0.0
      %1441 = vmatpush1.msra.mxu0 0.0
      %1442 = vmatprep.subr.mxu0 0.0
      %1443 = vmatpush1.msra.mxu0 0.0
      %1444 = vmatprep.subr.mxu0 0.0
      %1445 = vmatpush1.msra.mxu0 0.0
      %1446 = vmatprep.subr.mxu0 0.0
      %1447 = vmatpush1.msra.mxu0 0.0
      %1448 = vmatprep.subr.mxu0 0.0
      %1449 = vmatpush1.msra.mxu0 0.0
      %1450 = vmatprep.subr.mxu0 0.0
      %1451 = vmatpush1.msra.mxu0 0.0
      %1452 = vmatprep.subr.mxu0 0.0
      %1453 = vmatpush1.msra.mxu0 0.0
      %1454 = vmatprep.subr.mxu0 0.0
      %1455 = vmatpush1.msra.mxu0 0.0
      %1456 = vmatprep.subr.mxu0 0.0
      %1457 = vmatpush1.msra.mxu0 0.0
      %1458 = vmatprep.subr.mxu0 0.0
      %1459 = vmatpush1.msra.mxu0 0.0
      %1460 = vmatprep.subr.mxu0 0.0
      %1461 = vmatpush1.msra.mxu0 0.0
      %1462 = vmatprep.subr.mxu0 0.0
      %1463 = vmatpush1.msra.mxu0 0.0
      %1464 = vmatprep.subr.mxu0 0.0
      %1465 = vmatpush1.msra.mxu0 0.0
      %1466 = vmatprep.subr.mxu0 0.0
      %1467 = vmatpush1.msra.mxu0 0.0
      %1468 = vmatprep.subr.mxu0 0.0
      %1469 = vmatpush1.msra.mxu0 0.0
      %1470 = vmatprep.subr.mxu0 0.0
      %1471 = vmatpush1.msra.mxu0 0.0
      %1472 = vmatprep.subr.mxu0 0.0
      %1473 = vmatpush1.msra.mxu0 0.0
      %1474 = vmatprep.subr.mxu0 0.0
      %1475 = vmatpush1.msra.mxu0 0.0
      %1476 = vmatprep.subr.mxu0 0.0
      %1477 = vmatpush1.msra.mxu0 0.0
      %1478 = vmatprep.subr.mxu0 0.0
      %1479 = vmatpush1.msra.mxu0 0.0
      %1480 = vmatprep.subr.mxu0 0.0
      %1481 = vmatpush1.msra.mxu0 0.0
      %1482 = vmatprep.subr.mxu0 0.0
      %1483 = vmatpush1.msra.mxu0 0.0
      %1484 = vmatprep.subr.mxu0 0.0
      %1485 = vmatpush1.msra.mxu0 0.0
      %1486 = vmatprep.subr.mxu0 0.0
      %1487 = vmatpush1.msra.mxu0 0.0
      %1488 = vmatprep.subr.mxu0 0.0
      %1489 = vmatpush1.msra.mxu0 0.0
      %1490 = vmatprep.subr.mxu0 0.0
      %1491 = vmatpush1.msra.mxu0 0.0
      %1492 = vmatprep.subr.mxu0 0.0
      %1493 = vmatpush1.msra.mxu0 0.0
      %1494 = vmatprep.mubr.f32.mxu0 0.0
      %v1495 = vand.u32 %v1111, 4294901760
      %v1496 = vsub.f32 %v1111, %v1495
      %v1497 = vand.u32 %v1496, 4294901760
      %1498 = vmatmul.mubr.f32.gmra.mrb[0].mxu0 %v1497
      %v1499 = vpop.f32.mrb[0].mxu0
      %v1500 = vadd.f32 %v1416, %v1499
      %v1501 = vpop.f32.mrb[0].mxu0
      %v1502 = vadd.f32 %v1418, %v1501
      %1503 = vdwg.mxu0
      %v1504 = vand.u32 %v1098, 4294901760
      %v1505 = vsub.f32 %v1098, %v1504
      %v1506 = vand.u32 %v1505, 4294901760
      %1507 = vmatprep.subr.mxu0 %v1506
      %v1508 = vand.u32 %v1097, 4294901760
      %v1509 = vsub.f32 %v1097, %v1508
      %v1510 = vand.u32 %v1509, 4294901760
      %1511 = vmatpush1.msra.mxu0 %v1510
      %v1512 = vand.u32 %v1100, 4294901760
      %v1513 = vsub.f32 %v1100, %v1512
      %v1514 = vand.u32 %v1513, 4294901760
      %1515 = vmatprep.subr.mxu0 %v1514
      %v1516 = vand.u32 %v1099, 4294901760
      %v1517 = vsub.f32 %v1099, %v1516
      %v1518 = vand.u32 %v1517, 4294901760
      %1519 = vmatpush1.msra.mxu0 %v1518
      %v1520 = vand.u32 %v1102, 4294901760
      %v1521 = vsub.f32 %v1102, %v1520
      %v1522 = vand.u32 %v1521, 4294901760
      %1523 = vmatprep.subr.mxu0 %v1522
      %v1524 = vand.u32 %v1101, 4294901760
      %v1525 = vsub.f32 %v1101, %v1524
      %v1526 = vand.u32 %v1525, 4294901760
      %1527 = vmatpush1.msra.mxu0 %v1526
      %v1528 = vand.u32 %v1104, 4294901760
      %v1529 = vsub.f32 %v1104, %v1528
      %v1530 = vand.u32 %v1529, 4294901760
      %1531 = vmatprep.subr.mxu0 %v1530
      %v1532 = vand.u32 %v1103, 4294901760
      %v1533 = vsub.f32 %v1103, %v1532
      %v1534 = vand.u32 %v1533, 4294901760
      %1535 = vmatpush1.msra.mxu0 %v1534
      %v1536 = vand.u32 %v1117, 4294901760
      %v1537 = vsub.f32 %v1117, %v1536
      %v1538 = vand.u32 %v1537, 4294901760
      %1539 = vmatprep.subr.mxu0 %v1538
      %v1540 = vand.u32 %v1114, 4294901760
      %v1541 = vsub.f32 %v1114, %v1540
      %v1542 = vand.u32 %v1541, 4294901760
      %1543 = vmatpush1.msra.mxu0 %v1542
      %1544 = vmatprep.subr.mxu0 0.0
      %1545 = vmatpush1.msra.mxu0 0.0
      %1546 = vmatprep.subr.mxu0 0.0
      %1547 = vmatpush1.msra.mxu0 0.0
      %1548 = vmatprep.subr.mxu0 0.0
      %1549 = vmatpush1.msra.mxu0 0.0
      %1550 = vmatprep.subr.mxu0 0.0
      %1551 = vmatpush1.msra.mxu0 0.0
      %1552 = vmatprep.subr.mxu0 0.0
      %1553 = vmatpush1.msra.mxu0 0.0
      %1554 = vmatprep.subr.mxu0 0.0
      %1555 = vmatpush1.msra.mxu0 0.0
      %1556 = vmatprep.subr.mxu0 0.0
      %1557 = vmatpush1.msra.mxu0 0.0
      %1558 = vmatprep.subr.mxu0 0.0
      %1559 = vmatpush1.msra.mxu0 0.0
      %1560 = vmatprep.subr.mxu0 0.0
      %1561 = vmatpush1.msra.mxu0 0.0
      %1562 = vmatprep.subr.mxu0 0.0
      %1563 = vmatpush1.msra.mxu0 0.0
      %1564 = vmatprep.subr.mxu0 0.0
      %1565 = vmatpush1.msra.mxu0 0.0
      %1566 = vmatprep.subr.mxu0 0.0
      %1567 = vmatpush1.msra.mxu0 0.0
      %1568 = vmatprep.subr.mxu0 0.0
      %1569 = vmatpush1.msra.mxu0 0.0
      %1570 = vmatprep.subr.mxu0 0.0
      %1571 = vmatpush1.msra.mxu0 0.0
      %1572 = vmatprep.subr.mxu0 0.0
      %1573 = vmatpush1.msra.mxu0 0.0
      %1574 = vmatprep.subr.mxu0 0.0
      %1575 = vmatpush1.msra.mxu0 0.0
      %1576 = vmatprep.subr.mxu0 0.0
      %1577 = vmatpush1.msra.mxu0 0.0
      %1578 = vmatprep.subr.mxu0 0.0
      %1579 = vmatpush1.msra.mxu0 0.0
      %1580 = vmatprep.subr.mxu0 0.0
      %1581 = vmatpush1.msra.mxu0 0.0
      %1582 = vmatprep.subr.mxu0 0.0
      %1583 = vmatpush1.msra.mxu0 0.0
      %1584 = vmatprep.subr.mxu0 0.0
      %1585 = vmatpush1.msra.mxu0 0.0
      %1586 = vmatprep.subr.mxu0 0.0
      %1587 = vmatpush1.msra.mxu0 0.0
      %1588 = vmatprep.subr.mxu0 0.0
      %1589 = vmatpush1.msra.mxu0 0.0
      %1590 = vmatprep.subr.mxu0 0.0
      %1591 = vmatpush1.msra.mxu0 0.0
      %1592 = vmatprep.subr.mxu0 0.0
      %1593 = vmatpush1.msra.mxu0 0.0
      %1594 = vmatprep.subr.mxu0 0.0
      %1595 = vmatpush1.msra.mxu0 0.0
      %1596 = vmatprep.subr.mxu0 0.0
      %1597 = vmatpush1.msra.mxu0 0.0
      %1598 = vmatprep.mubr.f32.mxu0 0.0
      %v1599 = vand.u32 %v1111, 4294901760
      %1600 = vmatmul.mubr.f32.gmra.mrb[0].mxu0 %v1599
      %v1601 = vpop.f32.mrb[0].mxu0
      %v1602 = vadd.f32 %v1500, %v1601
      %v1603 = vpop.f32.mrb[0].mxu0
      %v1604 = vadd.f32 %v1502, %v1603
      %1605 = vdwg.mxu0
      %v1606 = vand.u32 %v1098, 4294901760
      %1607 = vmatprep.subr.mxu0 %v1606
      %v1608 = vand.u32 %v1097, 4294901760
      %1609 = vmatpush1.msra.mxu0 %v1608
      %v1610 = vand.u32 %v1100, 4294901760
      %1611 = vmatprep.subr.mxu0 %v1610
      %v1612 = vand.u32 %v1099, 4294901760
      %1613 = vmatpush1.msra.mxu0 %v1612
      %v1614 = vand.u32 %v1102, 4294901760
      %1615 = vmatprep.subr.mxu0 %v1614
      %v1616 = vand.u32 %v1101, 4294901760
      %1617 = vmatpush1.msra.mxu0 %v1616
      %v1618 = vand.u32 %v1104, 4294901760
      %1619 = vmatprep.subr.mxu0 %v1618
      %v1620 = vand.u32 %v1103, 4294901760
      %1621 = vmatpush1.msra.mxu0 %v1620
      %v1622 = vand.u32 %v1117, 4294901760
      %1623 = vmatprep.subr.mxu0 %v1622
      %v1624 = vand.u32 %v1114, 4294901760
      %1625 = vmatpush1.msra.mxu0 %v1624
      %1626 = vmatprep.subr.mxu0 0.0
      %1627 = vmatpush1.msra.mxu0 0.0
      %1628 = vmatprep.subr.mxu0 0.0
      %1629 = vmatpush1.msra.mxu0 0.0
      %1630 = vmatprep.subr.mxu0 0.0
      %1631 = vmatpush1.msra.mxu0 0.0
      %1632 = vmatprep.subr.mxu0 0.0
      %1633 = vmatpush1.msra.mxu0 0.0
      %1634 = vmatprep.subr.mxu0 0.0
      %1635 = vmatpush1.msra.mxu0 0.0
      %1636 = vmatprep.subr.mxu0 0.0
      %1637 = vmatpush1.msra.mxu0 0.0
      %1638 = vmatprep.subr.mxu0 0.0
      %1639 = vmatpush1.msra.mxu0 0.0
      %1640 = vmatprep.subr.mxu0 0.0
      %1641 = vmatpush1.msra.mxu0 0.0
      %1642 = vmatprep.subr.mxu0 0.0
      %1643 = vmatpush1.msra.mxu0 0.0
      %1644 = vmatprep.subr.mxu0 0.0
      %1645 = vmatpush1.msra.mxu0 0.0
      %1646 = vmatprep.subr.mxu0 0.0
      %1647 = vmatpush1.msra.mxu0 0.0
      %1648 = vmatprep.subr.mxu0 0.0
      %1649 = vmatpush1.msra.mxu0 0.0
      %1650 = vmatprep.subr.mxu0 0.0
      %1651 = vmatpush1.msra.mxu0 0.0
      %1652 = vmatprep.subr.mxu0 0.0
      %1653 = vmatpush1.msra.mxu0 0.0
      %1654 = vmatprep.subr.mxu0 0.0
      %1655 = vmatpush1.msra.mxu0 0.0
      %1656 = vmatprep.subr.mxu0 0.0
      %1657 = vmatpush1.msra.mxu0 0.0
      %1658 = vmatprep.subr.mxu0 0.0
      %1659 = vmatpush1.msra.mxu0 0.0
      %1660 = vmatprep.subr.mxu0 0.0
      %1661 = vmatpush1.msra.mxu0 0.0
      %1662 = vmatprep.subr.mxu0 0.0
      %1663 = vmatpush1.msra.mxu0 0.0
      %1664 = vmatprep.subr.mxu0 0.0
      %1665 = vmatpush1.msra.mxu0 0.0
      %1666 = vmatprep.subr.mxu0 0.0
      %1667 = vmatpush1.msra.mxu0 0.0
      %1668 = vmatprep.subr.mxu0 0.0
      %1669 = vmatpush1.msra.mxu0 0.0
      %1670 = vmatprep.subr.mxu0 0.0
      %1671 = vmatpush1.msra.mxu0 0.0
      %1672 = vmatprep.subr.mxu0 0.0
      %1673 = vmatpush1.msra.mxu0 0.0
      %1674 = vmatprep.subr.mxu0 0.0
      %1675 = vmatpush1.msra.mxu0 0.0
      %1676 = vmatprep.subr.mxu0 0.0
      %1677 = vmatpush1.msra.mxu0 0.0
      %1678 = vmatprep.subr.mxu0 0.0
      %1679 = vmatpush1.msra.mxu0 0.0
      %1680 = vmatprep.mubr.f32.mxu0 0.0
      %v1681 = vand.u32 %v1111, 4294901760
      %1682 = vmatmul.mubr.f32.gmra.mrb[0].mxu0 %v1681
      %v1683 = vpop.f32.mrb[0].mxu0
      %v1684 = vadd.f32 %v1602, %v1683
      %v1685 = vpop.f32.mrb[0].mxu0
      %v1686 = vadd.f32 %v1604, %v1685
      %1687 = vdwg.mxu0
      %v1688 = vsel %vm370, %v1684, 0.0
      %v1689 = vsel %vm370, %v1686, 0.0
      %v1690 = vadd.f32 %v1688, %v1689
      %1691 = vadd.xlane.f32.xlu0 %v1690
      %v1692 = vpop.xlane.xlu0 %1691
      %v1693 = vmul.f32 %v1692, %v968
      %v1694 = vmul.f32 %v1684, %v1684
      %v1695 = vmul.f32 %v1686, %v1686
      %v1696 = vsel %vm370, %v1694, 0.0
      %v1697 = vsel %vm370, %v1695, 0.0
      %v1698 = vadd.f32 %v1696, %v1697
      %1699 = vadd.xlane.f32.xlu0 %v1698
      %v1700 = vpop.xlane.xlu0 %1699
      %v1701 = vmul.f32 %v1700, %v968
      %v1702 = vmul.f32 %v1693, %v1693
      %v1703 = vsub.f32 %v1701, %v1702
      %v1704 = vmax.f32 %v1703, 0.0
      %v1705 = vsub.f32 %v1684, %v1693
      %v1706 = vsub.f32 %v1686, %v1693
      %v1707 = vadd.f32 %v1704, 1e-05
      %v1708 = vrsqrt.pop %v1707
      %v1709 = vmul.f32 %v1705, %v1708
      %v1710 = vmul.f32 %v1706, %v1708
      %v1713 = vcombine.low %v1709, %v1710
      %v1715 = vadd.f32 %v225, %v1713
      %1716 = vst [vmem:[%s224] sm:$0xff] %v1715
      %p1717 = scmp.lt.s32.totalorder %s16, 1
      %s1718 = scalar_select %p1717, %s16, 1
      %s1719 = smul.addr %s1718, 2
      %s1720 = smul.addr %s1719, 4
      %s1721 = scalar_lea.vmem %s5, %s1720
      // Predicated region
      $region41: #{res_block.1} parent=39 // pred_check
        %p1722 = pneg %p144
      $region42: #{res_block.1} parent=39 // pred_check_branch
        %1724 = sbr.rel (%p1722) target = $region44
      $region43: #{res_block.1} parent=39 // pred_region
        _
      $region44: #{res_block.1} parent=39 // pred_fallthru
        _
    $region40: #{res_block.1} parent=5 // pred_fallthru
      _
    %p1725 = scmp.le.s32.totalorder 2, %s11
    // Predicated region
    $region45: #{res_block.1} parent=5 // pred_check
      %p1726 = pneg %p1725
    $region46: #{res_block.1} parent=5 // pred_check_branch
      %1728 = sbr.rel (%p1726) target = $region48
    $region47: #{res_block.1} parent=5 // pred_region
      %s1729 = ssub.s32 %s11, 2
      // Predicated region
      $region49: #{res_block.1} parent=47 // pred_check
        %p1730 = pneg %p150
      $region50: #{res_block.1} parent=47 // pred_check_branch
        %1732 = sbr.rel (%p1730) target = $region52
      $region51: #{res_block.1} parent=47 // pred_region
        %p1733 = scmp.lt.s32.totalorder %s17, 1
        %s1734 = scalar_select %p1733, %s17, 1
        %s1735 = smul.addr %s1734, 2
        %s1736 = smul.addr %s1735, 4
        %s1737 = scalar_lea.vmem %s5, %s1736
      $region52: #{res_block.1} parent=47 // pred_fallthru
        _
    $region48: #{res_block.1} parent=5 // pred_fallthru
      _
  $region6: #{res_block.1} parent=0 // loop_footer
    %s15 = sadd.s32 1, %s11
  $region7: #{res_block.1} parent=0 // loop_footer_branch
    %10 = sbr.rel target = $region3
  $region8: #{res_block.1} parent=0 // loop_exit
    _

</llo_original>
